<compile_context>
chip_gen: v6e
topology: v6e:2x2x1
jax: 0.10.0
libtpu: 0.0.40
codegen_flags: <defaults>
</compile_context>

<pallas_src>
import functools

import jax
import jax.numpy as jnp
from jax.experimental import pallas as pl
from jax.experimental.pallas import tpu as pltpu


# ----------------------------------------------------------------------------
# Fused kernel
# ----------------------------------------------------------------------------
def _dlgn_fused_kernel(x_ref, *refs, beta, num_layers):
    """Fused DLGN_FC_BN forward for one batch tile. Weights resident in VMEM.

    Ref layout:
      x_ref                                  (tb, D)       bf16 flattened input
      per layer l (8 refs each):
        wg  (D_prev, H) bf16   gating Linear weight (transposed vs. torch)
        bg  (1, H)      f32    gating Linear bias
        gsc (1, H)      f32    gating BN scale = gamma / sqrt(var + eps)
        gsh (1, H)      f32    gating BN shift = beta_bn - mean * scale
        wv  (D_prev, H) bf16   value Linear weight
        bv  (1, H)      f32    value Linear bias
        vsc (1, H)      f32    value BN scale
        vsh (1, H)      f32    value BN shift
      w_out (H_last, C_pad) bf16,  b_out (1, C_pad) f32
      o_ref (tb, C_pad) f32   lane-dense padded logits (sliced in the wrapper)
    """
    o_ref = refs[-1]
    w_out_ref = refs[8 * num_layers]
    b_out_ref = refs[8 * num_layers + 1]

    g_act = x_ref[...]                   # gating activation (bf16 MXU operand)
    v_act = None                         # value activation (f32)

    for l in range(num_layers):
        (wg_ref, bg_ref, gsc_ref, gsh_ref,
         wv_ref, bv_ref, vsc_ref, vsh_ref) = refs[8 * l: 8 * (l + 1)]

        # ---- gating network: Linear -> BatchNorm (eval mode, pre-folded) ----
        g_lin = jnp.dot(g_act, wg_ref[...],
                        preferred_element_type=jnp.float32) + bg_ref[...]
        g_bn = g_lin * gsc_ref[...] + gsh_ref[...]

        # gates = sigmoid(beta * <output of every gating-net module>)
        gate_lin = 1.0 / (1.0 + jnp.exp(-beta * g_lin))
        gate_bn = 1.0 / (1.0 + jnp.exp(-beta * g_bn))

        # ---- value network (ALLONES input): Linear, *gate, BN, *gate --------
        if l == 0:
            # value-net input is ones(B, D)  =>  ones @ Wv == column-sum of Wv
            v_lin = (jnp.sum(wv_ref[...].astype(jnp.float32), axis=0,
                             keepdims=True) + bv_ref[...])           # (1, H)
        else:
            v_lin = jnp.dot(v_act.astype(jnp.bfloat16), wv_ref[...],
                            preferred_element_type=jnp.float32) + bv_ref[...]
        v_act = v_lin * gate_lin                     # broadcasts (1,H)->(tb,H) at l==0
        v_act = v_act * vsc_ref[...] + vsh_ref[...]  # value-net BN (eval, folded)
        v_act = v_act * gate_bn

        g_act = g_bn.astype(jnp.bfloat16)            # next gating-layer operand

    logits = jnp.dot(v_act.astype(jnp.bfloat16), w_out_ref[...],
                     preferred_element_type=jnp.float32) + b_out_ref[...]
    o_ref[...] = logits.astype(o_ref.dtype)


# ----------------------------------------------------------------------------
# Wrapper
# ----------------------------------------------------------------------------
def dlgn_fc_bn_forward(inp, kernel_operands, *, num_layers, num_classes, beta,
                       batch_tile=128):
    """Forward pass of DLGN_FC_BN_Network; returns logits (B, num_classes)."""
    assert num_layers >= 1
    assert len(kernel_operands) == 8 * num_layers + 2
    batch = inp.shape[0]
    x = inp.reshape(batch, -1).astype(jnp.bfloat16)   # torch.flatten(inp, 1)
    d_in = x.shape[1]
    c_pad = kernel_operands[-1].shape[-1]

    # Tile the batch over a 1-D "parallel" grid; weights stay VMEM-resident.
    if batch <= batch_tile:
        tb, b_pad = batch, batch
    else:
        tb = batch_tile
        b_pad = int(pl.cdiv(batch, tb)) * tb
        x = jnp.pad(x, ((0, b_pad - batch), (0, 0)))
    grid = (b_pad // tb,)

    operands = (x,) + tuple(kernel_operands)

    x_spec = pl.BlockSpec((tb, d_in), lambda i: (i, 0))
    w_specs = [pl.BlockSpec(op.shape, lambda i: (0, 0))   # constant => resident
               for op in kernel_operands]
    out_spec = pl.BlockSpec((tb, c_pad), lambda i: (i, 0))

    # Advisory cost hint so XLA can schedule around the fused custom call.
    flops, transcendentals = 0, 0
    prev = d_in
    for l in range(num_layers):
        h = kernel_operands[8 * l].shape[1]
        flops += 2 * b_pad * prev * h                              # gating Linear
        flops += (prev * h) if l == 0 else (2 * b_pad * prev * h)  # value Linear
        flops += 12 * b_pad * h                                    # BN + gates
        transcendentals += 2 * b_pad * h                           # 2 sigmoids
        prev = h
    flops += 2 * b_pad * prev * c_pad                              # output Linear
    bytes_accessed = sum(int(a.size) * a.dtype.itemsize for a in operands)
    bytes_accessed += b_pad * c_pad * 4

    out = pl.pallas_call(
        functools.partial(_dlgn_fused_kernel, beta=float(beta),
                          num_layers=num_layers),
        out_shape=jax.ShapeDtypeStruct((b_pad, c_pad), jnp.float32),
        grid=grid,
        in_specs=[x_spec] + w_specs,
        out_specs=out_spec,
        compiler_params=pltpu.CompilerParams(
            dimension_semantics=("parallel",)),
        cost_estimate=pl.CostEstimate(flops=flops,
                                      transcendentals=transcendentals,
                                      bytes_accessed=bytes_accessed),
    )(*operands)
    return out[:batch, :num_classes]


# ----------------------------------------------------------------------------
# Parameter construction / preprocessing
# ----------------------------------------------------------------------------
def init_dlgn_params(key, nodes_in_each_layer_list, input_size, num_classes):
    """Deterministic params mimicking the PyTorch module.

    Linear: U(-1/sqrt(fan_in), 1/sqrt(fan_in)) for weight and bias (weights
    stored transposed: (fan_in, fan_out)).  BatchNorm1d: (gamma, beta,
    running_mean, running_var); running stats are randomized (as after some
    training) so the eval-mode BN math is actually exercised by the check.
    """
    def linear(k, fan_in, fan_out):
        kw, kb = jax.random.split(k)
        bound = 1.0 / (fan_in ** 0.5)
        w = jax.random.uniform(kw, (fan_in, fan_out), jnp.float32, -bound, bound)
        b = jax.random.uniform(kb, (fan_out,), jnp.float32, -bound, bound)
        return w, b

    def batchnorm(k, n):
        k1, k2, k3, k4 = jax.random.split(k, 4)
        gamma = jax.random.uniform(k1, (n,), jnp.float32, 0.5, 1.5)
        beta_bn = 0.1 * jax.random.normal(k2, (n,), jnp.float32)
        mean = 0.1 * jax.random.normal(k3, (n,), jnp.float32)
        var = jax.random.uniform(k4, (n,), jnp.float32, 0.5, 1.5)
        return gamma, beta_bn, mean, var

    params = {"gating": [], "value": []}
    prev = input_size
    for n in nodes_in_each_layer_list:
        key, kg, kgb, kv, kvb = jax.random.split(key, 5)
        params["gating"].append({"linear": linear(kg, prev, n),
                                 "bn": batchnorm(kgb, n)})
        params["value"].append({"linear": linear(kv, prev, n),
                                "bn": batchnorm(kvb, n)})
        prev = n
    key, ko = jax.random.split(key)
    params["output"] = linear(ko, prev, num_classes)
    return params


def _fold_bn(gamma, beta_bn, mean, var, eps):
    scale = gamma / jnp.sqrt(var + eps)
    shift = beta_bn - mean * scale
    return scale.reshape(1, -1), shift.reshape(1, -1)


def prepare_kernel_operands(params, num_classes, *, lane=128, bn_eps=1e-5):
    """One-time preprocessing: fold eval-mode BN into (scale, shift), cast
    matmul weights to bf16, reshape per-channel vectors to (1, H), and zero-pad
    the output layer to a lane-dense width (multiple of 128)."""
    ops = []
    for g_layer, v_layer in zip(params["gating"], params["value"]):
        wg, bg = g_layer["linear"]
        gsc, gsh = _fold_bn(*g_layer["bn"], bn_eps)
        wv, bv = v_layer["linear"]
        vsc, vsh = _fold_bn(*v_layer["bn"], bn_eps)
        ops += [wg.astype(jnp.bfloat16), bg.reshape(1, -1), gsc, gsh,
                wv.astype(jnp.bfloat16), bv.reshape(1, -1), vsc, vsh]
    wo, bo = params["output"]
    c_pad = int(pl.cdiv(num_classes, lane)) * lane
    wo_p = jnp.zeros((wo.shape[0], c_pad), jnp.bfloat16)
    wo_p = wo_p.at[:, :num_classes].set(wo.astype(jnp.bfloat16))
    bo_p = jnp.zeros((1, c_pad), jnp.float32)
    bo_p = bo_p.at[:, :num_classes].set(bo.reshape(1, -1))
    ops += [wo_p, bo_p]
    return tuple(ops)


# ----------------------------------------------------------------------------
# Plain-JAX reference (mirrors the kernel's bf16-operand / f32-accum numerics)
# ----------------------------------------------------------------------------
def dlgn_reference(inp, params, *, beta, num_classes, bn_eps=1e-5):
    def bf16(a):
        return a.astype(jnp.bfloat16).astype(jnp.float32)

    def bn(x, p):
        gamma, beta_bn, mean, var = p
        return gamma * (x - mean) / jnp.sqrt(var + bn_eps) + beta_bn

    batch = inp.shape[0]
    x = inp.reshape(batch, -1)

    # gating network: chained Linear -> BN, collect output of every module
    gates = []
    g = bf16(x)
    for layer in params["gating"]:
        w, b = layer["linear"]
        g_lin = g @ bf16(w) + b
        g_bn = bn(g_lin, layer["bn"])
        gates.append(jax.nn.sigmoid(beta * g_lin))
        gates.append(jax.nn.sigmoid(beta * g_bn))
        g = bf16(g_bn)

    # value network: all-ones input, gate multiply after every module
    v = jnp.ones_like(x)
    gi = 0
    for layer in params["value"]:
        w, b = layer["linear"]
        v = bf16(v) @ bf16(w) + b
        v = v * gates[gi]; gi += 1
        v = bn(v, layer["bn"])
        v = v * gates[gi]; gi += 1

    wo, bo = params["output"]
    return bf16(v) @ bf16(wo) + bo


if __name__ == "__main__":
    key = jax.random.PRNGKey(0)
    k_inp, k_par = jax.random.split(key)

    batch, chan, height, width = 2, 4, 16, 16
    input_size = chan * height * width            # 1024
    nodes_in_each_layer_list = [32, 64, 32]
    num_classes = 10
    beta = 4.0                                    # module default

    x = jax.random.normal(k_inp, (batch, chan, height, width), jnp.float32)
    params = init_dlgn_params(k_par, nodes_in_each_layer_list, input_size,
                              num_classes)
    operands = prepare_kernel_operands(params, num_classes)

    fwd = jax.jit(functools.partial(dlgn_fc_bn_forward,
                                    num_layers=len(nodes_in_each_layer_list),
                                    num_classes=num_classes, beta=beta))
    out = fwd(x, operands)
    jax.block_until_ready(out)

    ref = dlgn_reference(x, params, beta=beta, num_classes=num_classes)
    assert out.shape == (batch, num_classes), out.shape
    max_err = float(jnp.max(jnp.abs(out - ref)))
    assert max_err < 1e-3, f"max abs err {max_err}"

    print("KERNEL_OK")
</pallas_src>

<mosaic_0001>
module attributes {stable_mosaic.version = 11 : i64} {
  func.func @_dlgn_fused_kernel(%arg0: i32, %arg1: memref<2x1024xbf16, #tpu.memory_space<vmem>>, %arg2: memref<1024x32xbf16, #tpu.memory_space<vmem>>, %arg3: memref<1x32xf32, #tpu.memory_space<vmem>>, %arg4: memref<1x32xf32, #tpu.memory_space<vmem>>, %arg5: memref<1x32xf32, #tpu.memory_space<vmem>>, %arg6: memref<1024x32xbf16, #tpu.memory_space<vmem>>, %arg7: memref<1x32xf32, #tpu.memory_space<vmem>>, %arg8: memref<1x32xf32, #tpu.memory_space<vmem>>, %arg9: memref<1x32xf32, #tpu.memory_space<vmem>>, %arg10: memref<32x64xbf16, #tpu.memory_space<vmem>>, %arg11: memref<1x64xf32, #tpu.memory_space<vmem>>, %arg12: memref<1x64xf32, #tpu.memory_space<vmem>>, %arg13: memref<1x64xf32, #tpu.memory_space<vmem>>, %arg14: memref<32x64xbf16, #tpu.memory_space<vmem>>, %arg15: memref<1x64xf32, #tpu.memory_space<vmem>>, %arg16: memref<1x64xf32, #tpu.memory_space<vmem>>, %arg17: memref<1x64xf32, #tpu.memory_space<vmem>>, %arg18: memref<64x32xbf16, #tpu.memory_space<vmem>>, %arg19: memref<1x32xf32, #tpu.memory_space<vmem>>, %arg20: memref<1x32xf32, #tpu.memory_space<vmem>>, %arg21: memref<1x32xf32, #tpu.memory_space<vmem>>, %arg22: memref<64x32xbf16, #tpu.memory_space<vmem>>, %arg23: memref<1x32xf32, #tpu.memory_space<vmem>>, %arg24: memref<1x32xf32, #tpu.memory_space<vmem>>, %arg25: memref<1x32xf32, #tpu.memory_space<vmem>>, %arg26: memref<32x128xbf16, #tpu.memory_space<vmem>>, %arg27: memref<1x128xf32, #tpu.memory_space<vmem>>, %arg28: memref<2x128xf32, #tpu.memory_space<vmem>>) attributes {dimension_semantics = [#tpu.dimension_semantics<parallel>], iteration_bounds = array<i64: 1>, scalar_prefetch = 0 : i64, scratch_operands = 0 : i64, tpu.core_type = #tpu.core_type<tc>, window_params = [{transform_indices = @transform_0, window_bounds = array<i64: 2, 1024>}, {pipeline_mode = #tpu.pipeline_mode<synchronous>, transform_indices = @transform_1, window_bounds = array<i64: 1024, 32>}, {pipeline_mode = #tpu.pipeline_mode<synchronous>, transform_indices = @transform_2, window_bounds = array<i64: 1, 32>}, {pipeline_mode = #tpu.pipeline_mode<synchronous>, transform_indices = @transform_3, window_bounds = array<i64: 1, 32>}, {pipeline_mode = #tpu.pipeline_mode<synchronous>, transform_indices = @transform_4, window_bounds = array<i64: 1, 32>}, {pipeline_mode = #tpu.pipeline_mode<synchronous>, transform_indices = @transform_5, window_bounds = array<i64: 1024, 32>}, {pipeline_mode = #tpu.pipeline_mode<synchronous>, transform_indices = @transform_6, window_bounds = array<i64: 1, 32>}, {pipeline_mode = #tpu.pipeline_mode<synchronous>, transform_indices = @transform_7, window_bounds = array<i64: 1, 32>}, {pipeline_mode = #tpu.pipeline_mode<synchronous>, transform_indices = @transform_8, window_bounds = array<i64: 1, 32>}, {pipeline_mode = #tpu.pipeline_mode<synchronous>, transform_indices = @transform_9, window_bounds = array<i64: 32, 64>}, {pipeline_mode = #tpu.pipeline_mode<synchronous>, transform_indices = @transform_10, window_bounds = array<i64: 1, 64>}, {pipeline_mode = #tpu.pipeline_mode<synchronous>, transform_indices = @transform_11, window_bounds = array<i64: 1, 64>}, {pipeline_mode = #tpu.pipeline_mode<synchronous>, transform_indices = @transform_12, window_bounds = array<i64: 1, 64>}, {pipeline_mode = #tpu.pipeline_mode<synchronous>, transform_indices = @transform_13, window_bounds = array<i64: 32, 64>}, {pipeline_mode = #tpu.pipeline_mode<synchronous>, transform_indices = @transform_14, window_bounds = array<i64: 1, 64>}, {pipeline_mode = #tpu.pipeline_mode<synchronous>, transform_indices = @transform_15, window_bounds = array<i64: 1, 64>}, {pipeline_mode = #tpu.pipeline_mode<synchronous>, transform_indices = @transform_16, window_bounds = array<i64: 1, 64>}, {pipeline_mode = #tpu.pipeline_mode<synchronous>, transform_indices = @transform_17, window_bounds = array<i64: 64, 32>}, {pipeline_mode = #tpu.pipeline_mode<synchronous>, transform_indices = @transform_18, window_bounds = array<i64: 1, 32>}, {pipeline_mode = #tpu.pipeline_mode<synchronous>, transform_indices = @transform_19, window_bounds = array<i64: 1, 32>}, {pipeline_mode = #tpu.pipeline_mode<synchronous>, transform_indices = @transform_20, window_bounds = array<i64: 1, 32>}, {pipeline_mode = #tpu.pipeline_mode<synchronous>, transform_indices = @transform_21, window_bounds = array<i64: 64, 32>}, {pipeline_mode = #tpu.pipeline_mode<synchronous>, transform_indices = @transform_22, window_bounds = array<i64: 1, 32>}, {pipeline_mode = #tpu.pipeline_mode<synchronous>, transform_indices = @transform_23, window_bounds = array<i64: 1, 32>}, {pipeline_mode = #tpu.pipeline_mode<synchronous>, transform_indices = @transform_24, window_bounds = array<i64: 1, 32>}, {pipeline_mode = #tpu.pipeline_mode<synchronous>, transform_indices = @transform_25, window_bounds = array<i64: 32, 128>}, {pipeline_mode = #tpu.pipeline_mode<synchronous>, transform_indices = @transform_26, window_bounds = array<i64: 1, 128>}, {transform_indices = @transform_27, window_bounds = array<i64: 2, 128>}]} {
    %c0 = arith.constant 0 : index
    %c0_0 = arith.constant 0 : index
    %0 = vector.load %arg1[%c0, %c0_0] : memref<2x1024xbf16, #tpu.memory_space<vmem>>, vector<2x1024xbf16>
    %c0_1 = arith.constant 0 : index
    %c0_2 = arith.constant 0 : index
    %1 = vector.load %arg2[%c0_1, %c0_2] : memref<1024x32xbf16, #tpu.memory_space<vmem>>, vector<1024x32xbf16>
    %cst = arith.constant dense<0.000000e+00> : vector<2x32xf32>
    %2 = tpu.matmul %0, %1, %cst {dimension_numbers = #tpu.dot_dimension_numbers<[1], [0], [0], [1], [0, 0, 1, 1], [], []>} : vector<2x1024xbf16>, vector<1024x32xbf16>, vector<2x32xf32> -> vector<2x32xf32>
    %c0_3 = arith.constant 0 : index
    %c0_4 = arith.constant 0 : index
    %3 = vector.load %arg3[%c0_3, %c0_4] : memref<1x32xf32, #tpu.memory_space<vmem>>, vector<1x32xf32>
    %4 = vector.broadcast %3 : vector<1x32xf32> to vector<2x32xf32>
    %5 = arith.addf %2, %4 : vector<2x32xf32>
    %c0_5 = arith.constant 0 : index
    %c0_6 = arith.constant 0 : index
    %6 = vector.load %arg4[%c0_5, %c0_6] : memref<1x32xf32, #tpu.memory_space<vmem>>, vector<1x32xf32>
    %7 = vector.broadcast %6 : vector<1x32xf32> to vector<2x32xf32>
    %8 = arith.mulf %5, %7 : vector<2x32xf32>
    %c0_7 = arith.constant 0 : index
    %c0_8 = arith.constant 0 : index
    %9 = vector.load %arg5[%c0_7, %c0_8] : memref<1x32xf32, #tpu.memory_space<vmem>>, vector<1x32xf32>
    %10 = vector.broadcast %9 : vector<1x32xf32> to vector<2x32xf32>
    %11 = arith.addf %8, %10 : vector<2x32xf32>
    %cst_9 = arith.constant -4.000000e+00 : f32
    %12 = vector.broadcast %cst_9 : f32 to vector<2x32xf32>
    %13 = arith.mulf %12, %5 : vector<2x32xf32>
    %14 = math.exp %13 : vector<2x32xf32>
    %cst_10 = arith.constant 1.000000e+00 : f32
    %15 = vector.broadcast %cst_10 : f32 to vector<2x32xf32>
    %16 = arith.addf %15, %14 : vector<2x32xf32>
    %cst_11 = arith.constant 1.000000e+00 : f32
    %17 = vector.broadcast %cst_11 : f32 to vector<2x32xf32>
    %18 = arith.divf %17, %16 : vector<2x32xf32>
    %cst_12 = arith.constant -4.000000e+00 : f32
    %19 = vector.broadcast %cst_12 : f32 to vector<2x32xf32>
    %20 = arith.mulf %19, %11 : vector<2x32xf32>
    %21 = math.exp %20 : vector<2x32xf32>
    %cst_13 = arith.constant 1.000000e+00 : f32
    %22 = vector.broadcast %cst_13 : f32 to vector<2x32xf32>
    %23 = arith.addf %22, %21 : vector<2x32xf32>
    %cst_14 = arith.constant 1.000000e+00 : f32
    %24 = vector.broadcast %cst_14 : f32 to vector<2x32xf32>
    %25 = arith.divf %24, %23 : vector<2x32xf32>
    %c0_15 = arith.constant 0 : index
    %c0_16 = arith.constant 0 : index
    %26 = vector.load %arg6[%c0_15, %c0_16] : memref<1024x32xbf16, #tpu.memory_space<vmem>>, vector<1024x32xbf16>
    %27 = arith.extf %26 : vector<1024x32xbf16> to vector<1024x32xf32>
    %cst_17 = arith.constant dense<0.000000e+00> : vector<32xf32>
    %28 = vector.multi_reduction <add>, %27, %cst_17 [0] : vector<1024x32xf32> to vector<32xf32>
    %29 = vector.shape_cast %28 : vector<32xf32> to vector<1x32xf32>
    %c0_18 = arith.constant 0 : index
    %c0_19 = arith.constant 0 : index
    %30 = vector.load %arg7[%c0_18, %c0_19] : memref<1x32xf32, #tpu.memory_space<vmem>>, vector<1x32xf32>
    %31 = arith.addf %29, %30 : vector<1x32xf32>
    %32 = vector.broadcast %31 : vector<1x32xf32> to vector<2x32xf32>
    %33 = arith.mulf %32, %18 : vector<2x32xf32>
    %c0_20 = arith.constant 0 : index
    %c0_21 = arith.constant 0 : index
    %34 = vector.load %arg8[%c0_20, %c0_21] : memref<1x32xf32, #tpu.memory_space<vmem>>, vector<1x32xf32>
    %35 = vector.broadcast %34 : vector<1x32xf32> to vector<2x32xf32>
    %36 = arith.mulf %33, %35 : vector<2x32xf32>
    %c0_22 = arith.constant 0 : index
    %c0_23 = arith.constant 0 : index
    %37 = vector.load %arg9[%c0_22, %c0_23] : memref<1x32xf32, #tpu.memory_space<vmem>>, vector<1x32xf32>
    %38 = vector.broadcast %37 : vector<1x32xf32> to vector<2x32xf32>
    %39 = arith.addf %36, %38 : vector<2x32xf32>
    %40 = arith.mulf %39, %25 : vector<2x32xf32>
    %41 = arith.truncf %11 : vector<2x32xf32> to vector<2x32xbf16>
    %c0_24 = arith.constant 0 : index
    %c0_25 = arith.constant 0 : index
    %42 = vector.load %arg10[%c0_24, %c0_25] : memref<32x64xbf16, #tpu.memory_space<vmem>>, vector<32x64xbf16>
    %cst_26 = arith.constant dense<0.000000e+00> : vector<2x64xf32>
    %43 = tpu.matmul %41, %42, %cst_26 {dimension_numbers = #tpu.dot_dimension_numbers<[1], [0], [0], [1], [0, 0, 1, 1], [], []>} : vector<2x32xbf16>, vector<32x64xbf16>, vector<2x64xf32> -> vector<2x64xf32>
    %c0_27 = arith.constant 0 : index
    %c0_28 = arith.constant 0 : index
    %44 = vector.load %arg11[%c0_27, %c0_28] : memref<1x64xf32, #tpu.memory_space<vmem>>, vector<1x64xf32>
    %45 = vector.broadcast %44 : vector<1x64xf32> to vector<2x64xf32>
    %46 = arith.addf %43, %45 : vector<2x64xf32>
    %c0_29 = arith.constant 0 : index
    %c0_30 = arith.constant 0 : index
    %47 = vector.load %arg12[%c0_29, %c0_30] : memref<1x64xf32, #tpu.memory_space<vmem>>, vector<1x64xf32>
    %48 = vector.broadcast %47 : vector<1x64xf32> to vector<2x64xf32>
    %49 = arith.mulf %46, %48 : vector<2x64xf32>
    %c0_31 = arith.constant 0 : index
    %c0_32 = arith.constant 0 : index
    %50 = vector.load %arg13[%c0_31, %c0_32] : memref<1x64xf32, #tpu.memory_space<vmem>>, vector<1x64xf32>
    %51 = vector.broadcast %50 : vector<1x64xf32> to vector<2x64xf32>
    %52 = arith.addf %49, %51 : vector<2x64xf32>
    %cst_33 = arith.constant -4.000000e+00 : f32
    %53 = vector.broadcast %cst_33 : f32 to vector<2x64xf32>
    %54 = arith.mulf %53, %46 : vector<2x64xf32>
    %55 = math.exp %54 : vector<2x64xf32>
    %cst_34 = arith.constant 1.000000e+00 : f32
    %56 = vector.broadcast %cst_34 : f32 to vector<2x64xf32>
    %57 = arith.addf %56, %55 : vector<2x64xf32>
    %cst_35 = arith.constant 1.000000e+00 : f32
    %58 = vector.broadcast %cst_35 : f32 to vector<2x64xf32>
    %59 = arith.divf %58, %57 : vector<2x64xf32>
    %cst_36 = arith.constant -4.000000e+00 : f32
    %60 = vector.broadcast %cst_36 : f32 to vector<2x64xf32>
    %61 = arith.mulf %60, %52 : vector<2x64xf32>
    %62 = math.exp %61 : vector<2x64xf32>
    %cst_37 = arith.constant 1.000000e+00 : f32
    %63 = vector.broadcast %cst_37 : f32 to vector<2x64xf32>
    %64 = arith.addf %63, %62 : vector<2x64xf32>
    %cst_38 = arith.constant 1.000000e+00 : f32
    %65 = vector.broadcast %cst_38 : f32 to vector<2x64xf32>
    %66 = arith.divf %65, %64 : vector<2x64xf32>
    %67 = arith.truncf %40 : vector<2x32xf32> to vector<2x32xbf16>
    %c0_39 = arith.constant 0 : index
    %c0_40 = arith.constant 0 : index
    %68 = vector.load %arg14[%c0_39, %c0_40] : memref<32x64xbf16, #tpu.memory_space<vmem>>, vector<32x64xbf16>
    %cst_41 = arith.constant dense<0.000000e+00> : vector<2x64xf32>
    %69 = tpu.matmul %67, %68, %cst_41 {dimension_numbers = #tpu.dot_dimension_numbers<[1], [0], [0], [1], [0, 0, 1, 1], [], []>} : vector<2x32xbf16>, vector<32x64xbf16>, vector<2x64xf32> -> vector<2x64xf32>
    %c0_42 = arith.constant 0 : index
    %c0_43 = arith.constant 0 : index
    %70 = vector.load %arg15[%c0_42, %c0_43] : memref<1x64xf32, #tpu.memory_space<vmem>>, vector<1x64xf32>
    %71 = vector.broadcast %70 : vector<1x64xf32> to vector<2x64xf32>
    %72 = arith.addf %69, %71 : vector<2x64xf32>
    %73 = arith.mulf %72, %59 : vector<2x64xf32>
    %c0_44 = arith.constant 0 : index
    %c0_45 = arith.constant 0 : index
    %74 = vector.load %arg16[%c0_44, %c0_45] : memref<1x64xf32, #tpu.memory_space<vmem>>, vector<1x64xf32>
    %75 = vector.broadcast %74 : vector<1x64xf32> to vector<2x64xf32>
    %76 = arith.mulf %73, %75 : vector<2x64xf32>
    %c0_46 = arith.constant 0 : index
    %c0_47 = arith.constant 0 : index
    %77 = vector.load %arg17[%c0_46, %c0_47] : memref<1x64xf32, #tpu.memory_space<vmem>>, vector<1x64xf32>
    %78 = vector.broadcast %77 : vector<1x64xf32> to vector<2x64xf32>
    %79 = arith.addf %76, %78 : vector<2x64xf32>
    %80 = arith.mulf %79, %66 : vector<2x64xf32>
    %81 = arith.truncf %52 : vector<2x64xf32> to vector<2x64xbf16>
    %c0_48 = arith.constant 0 : index
    %c0_49 = arith.constant 0 : index
    %82 = vector.load %arg18[%c0_48, %c0_49] : memref<64x32xbf16, #tpu.memory_space<vmem>>, vector<64x32xbf16>
    %cst_50 = arith.constant dense<0.000000e+00> : vector<2x32xf32>
    %83 = tpu.matmul %81, %82, %cst_50 {dimension_numbers = #tpu.dot_dimension_numbers<[1], [0], [0], [1], [0, 0, 1, 1], [], []>} : vector<2x64xbf16>, vector<64x32xbf16>, vector<2x32xf32> -> vector<2x32xf32>
    %c0_51 = arith.constant 0 : index
    %c0_52 = arith.constant 0 : index
    %84 = vector.load %arg19[%c0_51, %c0_52] : memref<1x32xf32, #tpu.memory_space<vmem>>, vector<1x32xf32>
    %85 = vector.broadcast %84 : vector<1x32xf32> to vector<2x32xf32>
    %86 = arith.addf %83, %85 : vector<2x32xf32>
    %c0_53 = arith.constant 0 : index
    %c0_54 = arith.constant 0 : index
    %87 = vector.load %arg20[%c0_53, %c0_54] : memref<1x32xf32, #tpu.memory_space<vmem>>, vector<1x32xf32>
    %88 = vector.broadcast %87 : vector<1x32xf32> to vector<2x32xf32>
    %89 = arith.mulf %86, %88 : vector<2x32xf32>
    %c0_55 = arith.constant 0 : index
    %c0_56 = arith.constant 0 : index
    %90 = vector.load %arg21[%c0_55, %c0_56] : memref<1x32xf32, #tpu.memory_space<vmem>>, vector<1x32xf32>
    %91 = vector.broadcast %90 : vector<1x32xf32> to vector<2x32xf32>
    %92 = arith.addf %89, %91 : vector<2x32xf32>
    %cst_57 = arith.constant -4.000000e+00 : f32
    %93 = vector.broadcast %cst_57 : f32 to vector<2x32xf32>
    %94 = arith.mulf %93, %86 : vector<2x32xf32>
    %95 = math.exp %94 : vector<2x32xf32>
    %cst_58 = arith.constant 1.000000e+00 : f32
    %96 = vector.broadcast %cst_58 : f32 to vector<2x32xf32>
    %97 = arith.addf %96, %95 : vector<2x32xf32>
    %cst_59 = arith.constant 1.000000e+00 : f32
    %98 = vector.broadcast %cst_59 : f32 to vector<2x32xf32>
    %99 = arith.divf %98, %97 : vector<2x32xf32>
    %cst_60 = arith.constant -4.000000e+00 : f32
    %100 = vector.broadcast %cst_60 : f32 to vector<2x32xf32>
    %101 = arith.mulf %100, %92 : vector<2x32xf32>
    %102 = math.exp %101 : vector<2x32xf32>
    %cst_61 = arith.constant 1.000000e+00 : f32
    %103 = vector.broadcast %cst_61 : f32 to vector<2x32xf32>
    %104 = arith.addf %103, %102 : vector<2x32xf32>
    %cst_62 = arith.constant 1.000000e+00 : f32
    %105 = vector.broadcast %cst_62 : f32 to vector<2x32xf32>
    %106 = arith.divf %105, %104 : vector<2x32xf32>
    %107 = arith.truncf %80 : vector<2x64xf32> to vector<2x64xbf16>
    %c0_63 = arith.constant 0 : index
    %c0_64 = arith.constant 0 : index
    %108 = vector.load %arg22[%c0_63, %c0_64] : memref<64x32xbf16, #tpu.memory_space<vmem>>, vector<64x32xbf16>
    %cst_65 = arith.constant dense<0.000000e+00> : vector<2x32xf32>
    %109 = tpu.matmul %107, %108, %cst_65 {dimension_numbers = #tpu.dot_dimension_numbers<[1], [0], [0], [1], [0, 0, 1, 1], [], []>} : vector<2x64xbf16>, vector<64x32xbf16>, vector<2x32xf32> -> vector<2x32xf32>
    %c0_66 = arith.constant 0 : index
    %c0_67 = arith.constant 0 : index
    %110 = vector.load %arg23[%c0_66, %c0_67] : memref<1x32xf32, #tpu.memory_space<vmem>>, vector<1x32xf32>
    %111 = vector.broadcast %110 : vector<1x32xf32> to vector<2x32xf32>
    %112 = arith.addf %109, %111 : vector<2x32xf32>
    %113 = arith.mulf %112, %99 : vector<2x32xf32>
    %c0_68 = arith.constant 0 : index
    %c0_69 = arith.constant 0 : index
    %114 = vector.load %arg24[%c0_68, %c0_69] : memref<1x32xf32, #tpu.memory_space<vmem>>, vector<1x32xf32>
    %115 = vector.broadcast %114 : vector<1x32xf32> to vector<2x32xf32>
    %116 = arith.mulf %113, %115 : vector<2x32xf32>
    %c0_70 = arith.constant 0 : index
    %c0_71 = arith.constant 0 : index
    %117 = vector.load %arg25[%c0_70, %c0_71] : memref<1x32xf32, #tpu.memory_space<vmem>>, vector<1x32xf32>
    %118 = vector.broadcast %117 : vector<1x32xf32> to vector<2x32xf32>
    %119 = arith.addf %116, %118 : vector<2x32xf32>
    %120 = arith.mulf %119, %106 : vector<2x32xf32>
    %121 = arith.truncf %120 : vector<2x32xf32> to vector<2x32xbf16>
    %c0_72 = arith.constant 0 : index
    %c0_73 = arith.constant 0 : index
    %122 = vector.load %arg26[%c0_72, %c0_73] : memref<32x128xbf16, #tpu.memory_space<vmem>>, vector<32x128xbf16>
    %cst_74 = arith.constant dense<0.000000e+00> : vector<2x128xf32>
    %123 = tpu.matmul %121, %122, %cst_74 {dimension_numbers = #tpu.dot_dimension_numbers<[1], [0], [0], [1], [0, 0, 1, 1], [], []>} : vector<2x32xbf16>, vector<32x128xbf16>, vector<2x128xf32> -> vector<2x128xf32>
    %c0_75 = arith.constant 0 : index
    %c0_76 = arith.constant 0 : index
    %124 = vector.load %arg27[%c0_75, %c0_76] : memref<1x128xf32, #tpu.memory_space<vmem>>, vector<1x128xf32>
    %125 = vector.broadcast %124 : vector<1x128xf32> to vector<2x128xf32>
    %126 = arith.addf %123, %125 : vector<2x128xf32>
    %c0_77 = arith.constant 0 : index
    %c0_78 = arith.constant 0 : index
    %127 = vector.load %arg28[%c0_77, %c0_78] : memref<2x128xf32, #tpu.memory_space<vmem>>, vector<2x128xf32>
    tpu.vector_store %arg28[%c0_77, %c0_78], %126 {strides = array<i32>} : memref<2x128xf32, #tpu.memory_space<vmem>>, vector<2x128xf32>,
    return
  }
  func.func @transform_0(%arg0: i32) -> (i32, i32) {
    %c0_i32 = arith.constant 0 : i32
    %c0_i32_0 = arith.constant 0 : i32
    return %arg0, %c0_i32 : i32, i32
  }
  func.func @transform_1(%arg0: i32) -> (i32, i32) {
    %c0_i32 = arith.constant 0 : i32
    %c0_i32_0 = arith.constant 0 : i32
    %c0_i32_1 = arith.constant 0 : i32
    return %c0_i32, %c0_i32_0 : i32, i32
  }
  func.func @transform_2(%arg0: i32) -> (i32, i32) {
    %c0_i32 = arith.constant 0 : i32
    %c0_i32_0 = arith.constant 0 : i32
    %c0_i32_1 = arith.constant 0 : i32
    return %c0_i32, %c0_i32_0 : i32, i32
  }
  func.func @transform_3(%arg0: i32) -> (i32, i32) {
    %c0_i32 = arith.constant 0 : i32
    %c0_i32_0 = arith.constant 0 : i32
    %c0_i32_1 = arith.constant 0 : i32
    return %c0_i32, %c0_i32_0 : i32, i32
  }
  func.func @transform_4(%arg0: i32) -> (i32, i32) {
    %c0_i32 = arith.constant 0 : i32
    %c0_i32_0 = arith.constant 0 : i32
    %c0_i32_1 = arith.constant 0 : i32
    return %c0_i32, %c0_i32_0 : i32, i32
  }
  func.func @transform_5(%arg0: i32) -> (i32, i32) {
    %c0_i32 = arith.constant 0 : i32
    %c0_i32_0 = arith.constant 0 : i32
    %c0_i32_1 = arith.constant 0 : i32
    return %c0_i32, %c0_i32_0 : i32, i32
  }
  func.func @transform_6(%arg0: i32) -> (i32, i32) {
    %c0_i32 = arith.constant 0 : i32
    %c0_i32_0 = arith.constant 0 : i32
    %c0_i32_1 = arith.constant 0 : i32
    return %c0_i32, %c0_i32_0 : i32, i32
  }
  func.func @transform_7(%arg0: i32) -> (i32, i32) {
    %c0_i32 = arith.constant 0 : i32
    %c0_i32_0 = arith.constant 0 : i32
    %c0_i32_1 = arith.constant 0 : i32
    return %c0_i32, %c0_i32_0 : i32, i32
  }
  func.func @transform_8(%arg0: i32) -> (i32, i32) {
    %c0_i32 = arith.constant 0 : i32
    %c0_i32_0 = arith.constant 0 : i32
    %c0_i32_1 = arith.constant 0 : i32
    return %c0_i32, %c0_i32_0 : i32, i32
  }
  func.func @transform_9(%arg0: i32) -> (i32, i32) {
    %c0_i32 = arith.constant 0 : i32
    %c0_i32_0 = arith.constant 0 : i32
    %c0_i32_1 = arith.constant 0 : i32
    return %c0_i32, %c0_i32_0 : i32, i32
  }
  func.func @transform_10(%arg0: i32) -> (i32, i32) {
    %c0_i32 = arith.constant 0 : i32
    %c0_i32_0 = arith.constant 0 : i32
    %c0_i32_1 = arith.constant 0 : i32
    return %c0_i32, %c0_i32_0 : i32, i32
  }
  func.func @transform_11(%arg0: i32) -> (i32, i32) {
    %c0_i32 = arith.constant 0 : i32
    %c0_i32_0 = arith.constant 0 : i32
    %c0_i32_1 = arith.constant 0 : i32
    return %c0_i32, %c0_i32_0 : i32, i32
  }
  func.func @transform_12(%arg0: i32) -> (i32, i32) {
    %c0_i32 = arith.constant 0 : i32
    %c0_i32_0 = arith.constant 0 : i32
    %c0_i32_1 = arith.constant 0 : i32
    return %c0_i32, %c0_i32_0 : i32, i32
  }
  func.func @transform_13(%arg0: i32) -> (i32, i32) {
    %c0_i32 = arith.constant 0 : i32
    %c0_i32_0 = arith.constant 0 : i32
    %c0_i32_1 = arith.constant 0 : i32
    return %c0_i32, %c0_i32_0 : i32, i32
  }
  func.func @transform_14(%arg0: i32) -> (i32, i32) {
    %c0_i32 = arith.constant 0 : i32
    %c0_i32_0 = arith.constant 0 : i32
    %c0_i32_1 = arith.constant 0 : i32
    return %c0_i32, %c0_i32_0 : i32, i32
  }
  func.func @transform_15(%arg0: i32) -> (i32, i32) {
    %c0_i32 = arith.constant 0 : i32
    %c0_i32_0 = arith.constant 0 : i32
    %c0_i32_1 = arith.constant 0 : i32
    return %c0_i32, %c0_i32_0 : i32, i32
  }
  func.func @transform_16(%arg0: i32) -> (i32, i32) {
    %c0_i32 = arith.constant 0 : i32
    %c0_i32_0 = arith.constant 0 : i32
    %c0_i32_1 = arith.constant 0 : i32
    return %c0_i32, %c0_i32_0 : i32, i32
  }
  func.func @transform_17(%arg0: i32) -> (i32, i32) {
    %c0_i32 = arith.constant 0 : i32
    %c0_i32_0 = arith.constant 0 : i32
    %c0_i32_1 = arith.constant 0 : i32
    return %c0_i32, %c0_i32_0 : i32, i32
  }
  func.func @transform_18(%arg0: i32) -> (i32, i32) {
    %c0_i32 = arith.constant 0 : i32
    %c0_i32_0 = arith.constant 0 : i32
    %c0_i32_1 = arith.constant 0 : i32
    return %c0_i32, %c0_i32_0 : i32, i32
  }
  func.func @transform_19(%arg0: i32) -> (i32, i32) {
    %c0_i32 = arith.constant 0 : i32
    %c0_i32_0 = arith.constant 0 : i32
    %c0_i32_1 = arith.constant 0 : i32
    return %c0_i32, %c0_i32_0 : i32, i32
  }
  func.func @transform_20(%arg0: i32) -> (i32, i32) {
    %c0_i32 = arith.constant 0 : i32
    %c0_i32_0 = arith.constant 0 : i32
    %c0_i32_1 = arith.constant 0 : i32
    return %c0_i32, %c0_i32_0 : i32, i32
  }
  func.func @transform_21(%arg0: i32) -> (i32, i32) {
    %c0_i32 = arith.constant 0 : i32
    %c0_i32_0 = arith.constant 0 : i32
    %c0_i32_1 = arith.constant 0 : i32
    return %c0_i32, %c0_i32_0 : i32, i32
  }
  func.func @transform_22(%arg0: i32) -> (i32, i32) {
    %c0_i32 = arith.constant 0 : i32
    %c0_i32_0 = arith.constant 0 : i32
    %c0_i32_1 = arith.constant 0 : i32
    return %c0_i32, %c0_i32_0 : i32, i32
  }
  func.func @transform_23(%arg0: i32) -> (i32, i32) {
    %c0_i32 = arith.constant 0 : i32
    %c0_i32_0 = arith.constant 0 : i32
    %c0_i32_1 = arith.constant 0 : i32
    return %c0_i32, %c0_i32_0 : i32, i32
  }
  func.func @transform_24(%arg0: i32) -> (i32, i32) {
    %c0_i32 = arith.constant 0 : i32
    %c0_i32_0 = arith.constant 0 : i32
    %c0_i32_1 = arith.constant 0 : i32
    return %c0_i32, %c0_i32_0 : i32, i32
  }
  func.func @transform_25(%arg0: i32) -> (i32, i32) {
    %c0_i32 = arith.constant 0 : i32
    %c0_i32_0 = arith.constant 0 : i32
    %c0_i32_1 = arith.constant 0 : i32
    return %c0_i32, %c0_i32_0 : i32, i32
  }
  func.func @transform_26(%arg0: i32) -> (i32, i32) {
    %c0_i32 = arith.constant 0 : i32
    %c0_i32_0 = arith.constant 0 : i32
    %c0_i32_1 = arith.constant 0 : i32
    return %c0_i32, %c0_i32_0 : i32, i32
  }
  func.func @transform_27(%arg0: i32) -> (i32, i32) {
    %c0_i32 = arith.constant 0 : i32
    %c0_i32_0 = arith.constant 0 : i32
    return %arg0, %c0_i32 : i32, i32
  }
}

</mosaic_0001>

<llo_original>
// kernel: dlgn_fc_bn_forward.1
$region0: #{dlgn_fc_bn_forward.1}
  #allocation0 [shape = 'u32[]', space=smem, size = 0x4, offset = 0x4, fixed_abs, tag = 'smem constant byte address 0x4 - core index']
  #allocation1 [shape = 'u32[144,128]{1,0:T(1,128)}', space=vmem, size = 0x12000, scoped, tag = 'internal scratch']
  %s0 = inlined_call_operand.vmem [shape: bf16[2,1024], index: 0, kind: input, shape index: {}]
  %s1 = inlined_call_operand.vmem [shape: bf16[1024,32], index: 1, kind: input, shape index: {}]
  %s2 = inlined_call_operand.vmem [shape: f32[1,32], index: 2, kind: input, shape index: {}]
  %s3 = inlined_call_operand.vmem [shape: f32[1,32], index: 3, kind: input, shape index: {}]
  %s4 = inlined_call_operand.vmem [shape: f32[1,32], index: 4, kind: input, shape index: {}]
  %s5 = inlined_call_operand.vmem [shape: bf16[1024,32], index: 5, kind: input, shape index: {}]
  %s6 = inlined_call_operand.vmem [shape: f32[1,32], index: 6, kind: input, shape index: {}]
  %s7 = inlined_call_operand.vmem [shape: f32[1,32], index: 7, kind: input, shape index: {}]
  %s8 = inlined_call_operand.vmem [shape: f32[1,32], index: 8, kind: input, shape index: {}]
  %s9 = inlined_call_operand.vmem [shape: bf16[32,64], index: 9, kind: input, shape index: {}]
  %s10 = inlined_call_operand.vmem [shape: f32[1,64], index: 10, kind: input, shape index: {}]
  %s11 = inlined_call_operand.vmem [shape: f32[1,64], index: 11, kind: input, shape index: {}]
  %s12 = inlined_call_operand.vmem [shape: f32[1,64], index: 12, kind: input, shape index: {}]
  %s13 = inlined_call_operand.vmem [shape: bf16[32,64], index: 13, kind: input, shape index: {}]
  %s14 = inlined_call_operand.vmem [shape: f32[1,64], index: 14, kind: input, shape index: {}]
  %s15 = inlined_call_operand.vmem [shape: f32[1,64], index: 15, kind: input, shape index: {}]
  %s16 = inlined_call_operand.vmem [shape: f32[1,64], index: 16, kind: input, shape index: {}]
  %s17 = inlined_call_operand.vmem [shape: bf16[64,32], index: 17, kind: input, shape index: {}]
  %s18 = inlined_call_operand.vmem [shape: f32[1,32], index: 18, kind: input, shape index: {}]
  %s19 = inlined_call_operand.vmem [shape: f32[1,32], index: 19, kind: input, shape index: {}]
  %s20 = inlined_call_operand.vmem [shape: f32[1,32], index: 20, kind: input, shape index: {}]
  %s21 = inlined_call_operand.vmem [shape: bf16[64,32], index: 21, kind: input, shape index: {}]
  %s22 = inlined_call_operand.vmem [shape: f32[1,32], index: 22, kind: input, shape index: {}]
  %s23 = inlined_call_operand.vmem [shape: f32[1,32], index: 23, kind: input, shape index: {}]
  %s24 = inlined_call_operand.vmem [shape: f32[1,32], index: 24, kind: input, shape index: {}]
  %s25 = inlined_call_operand.vmem [shape: bf16[32,128], index: 25, kind: input, shape index: {}]
  %s26 = inlined_call_operand.vmem [shape: f32[1,128], index: 26, kind: input, shape index: {}]
  %s27 = inlined_call_operand.hbm [shape: f32[2,128], index: 27, kind: output, shape index: {}]
  %s28 = sld [smem:[#allocation0]]
  $region118: #{dlgn_fc_bn_forward.1} parent=0
    _
  %s30 = ssub.s32 1, %s28
  %s31 = scalar_select 0, %s30, %s28
  $region1: #{dlgn_fc_bn_forward.1} parent=0
    #allocation2 [shape = 'u8[1024]{0}', space=vmem, size = 0x400, scoped, tag = 'output window, operand 0, single buffered']
    #allocation3 [shape = 's32[1]{0}', space=sflag, size = 0x4, scoped, tag = 'scoped memory for dlgn_fc_bn_forward.1']
    %32 = vsyncpa [#allocation3], 0
    // Predicated region
    $region2: #{dlgn_fc_bn_forward.1} parent=1 // pred_check
      _
    $region3: #{dlgn_fc_bn_forward.1} parent=1 // pred_check_branch
      %34 = sbr.rel (0) target = $region5
    $region4: #{dlgn_fc_bn_forward.1} parent=1 // pred_region
      _
    $region5: #{dlgn_fc_bn_forward.1} parent=1 // pred_fallthru
      _
    // Predicated region
    $region6: #{dlgn_fc_bn_forward.1} parent=1 // pred_check
      _
    $region7: #{dlgn_fc_bn_forward.1} parent=1 // pred_check_branch
      %36 = sbr.rel (0) target = $region9
    $region8: #{dlgn_fc_bn_forward.1} parent=1 // pred_region
      _
    $region9: #{dlgn_fc_bn_forward.1} parent=1 // pred_fallthru
      _
    // Predicated region
    $region10: #{dlgn_fc_bn_forward.1} parent=1 // pred_check
      _
    $region11: #{dlgn_fc_bn_forward.1} parent=1 // pred_check_branch
      %38 = sbr.rel (0) target = $region13
    $region12: #{dlgn_fc_bn_forward.1} parent=1 // pred_region
      _
    $region13: #{dlgn_fc_bn_forward.1} parent=1 // pred_fallthru
      _
    // Predicated region
    $region14: #{dlgn_fc_bn_forward.1} parent=1 // pred_check
      _
    $region15: #{dlgn_fc_bn_forward.1} parent=1 // pred_check_branch
      %40 = sbr.rel (0) target = $region17
    $region16: #{dlgn_fc_bn_forward.1} parent=1 // pred_region
      _
    $region17: #{dlgn_fc_bn_forward.1} parent=1 // pred_fallthru
      _
    // Predicated region
    $region18: #{dlgn_fc_bn_forward.1} parent=1 // pred_check
      _
    $region19: #{dlgn_fc_bn_forward.1} parent=1 // pred_check_branch
      %42 = sbr.rel (0) target = $region21
    $region20: #{dlgn_fc_bn_forward.1} parent=1 // pred_region
      _
    $region21: #{dlgn_fc_bn_forward.1} parent=1 // pred_fallthru
      _
    // Predicated region
    $region22: #{dlgn_fc_bn_forward.1} parent=1 // pred_check
      _
    $region23: #{dlgn_fc_bn_forward.1} parent=1 // pred_check_branch
      %44 = sbr.rel (0) target = $region25
    $region24: #{dlgn_fc_bn_forward.1} parent=1 // pred_region
      _
    $region25: #{dlgn_fc_bn_forward.1} parent=1 // pred_fallthru
      _
    // Predicated region
    $region26: #{dlgn_fc_bn_forward.1} parent=1 // pred_check
      _
    $region27: #{dlgn_fc_bn_forward.1} parent=1 // pred_check_branch
      %46 = sbr.rel (0) target = $region29
    $region28: #{dlgn_fc_bn_forward.1} parent=1 // pred_region
      _
    $region29: #{dlgn_fc_bn_forward.1} parent=1 // pred_fallthru
      _
    // Predicated region
    $region30: #{dlgn_fc_bn_forward.1} parent=1 // pred_check
      _
    $region31: #{dlgn_fc_bn_forward.1} parent=1 // pred_check_branch
      %48 = sbr.rel (0) target = $region33
    $region32: #{dlgn_fc_bn_forward.1} parent=1 // pred_region
      _
    $region33: #{dlgn_fc_bn_forward.1} parent=1 // pred_fallthru
      _
    // Predicated region
    $region34: #{dlgn_fc_bn_forward.1} parent=1 // pred_check
      _
    $region35: #{dlgn_fc_bn_forward.1} parent=1 // pred_check_branch
      %50 = sbr.rel (0) target = $region37
    $region36: #{dlgn_fc_bn_forward.1} parent=1 // pred_region
      _
    $region37: #{dlgn_fc_bn_forward.1} parent=1 // pred_fallthru
      _
    // Predicated region
    $region38: #{dlgn_fc_bn_forward.1} parent=1 // pred_check
      _
    $region39: #{dlgn_fc_bn_forward.1} parent=1 // pred_check_branch
      %52 = sbr.rel (0) target = $region41
    $region40: #{dlgn_fc_bn_forward.1} parent=1 // pred_region
      _
    $region41: #{dlgn_fc_bn_forward.1} parent=1 // pred_fallthru
      _
    // Predicated region
    $region42: #{dlgn_fc_bn_forward.1} parent=1 // pred_check
      _
    $region43: #{dlgn_fc_bn_forward.1} parent=1 // pred_check_branch
      %54 = sbr.rel (0) target = $region45
    $region44: #{dlgn_fc_bn_forward.1} parent=1 // pred_region
      _
    $region45: #{dlgn_fc_bn_forward.1} parent=1 // pred_fallthru
      _
    // Predicated region
    $region46: #{dlgn_fc_bn_forward.1} parent=1 // pred_check
      _
    $region47: #{dlgn_fc_bn_forward.1} parent=1 // pred_check_branch
      %56 = sbr.rel (0) target = $region49
    $region48: #{dlgn_fc_bn_forward.1} parent=1 // pred_region
      _
    $region49: #{dlgn_fc_bn_forward.1} parent=1 // pred_fallthru
      _
    // Predicated region
    $region50: #{dlgn_fc_bn_forward.1} parent=1 // pred_check
      _
    $region51: #{dlgn_fc_bn_forward.1} parent=1 // pred_check_branch
      %58 = sbr.rel (0) target = $region53
    $region52: #{dlgn_fc_bn_forward.1} parent=1 // pred_region
      _
    $region53: #{dlgn_fc_bn_forward.1} parent=1 // pred_fallthru
      _
    // Predicated region
    $region54: #{dlgn_fc_bn_forward.1} parent=1 // pred_check
      _
    $region55: #{dlgn_fc_bn_forward.1} parent=1 // pred_check_branch
      %60 = sbr.rel (0) target = $region57
    $region56: #{dlgn_fc_bn_forward.1} parent=1 // pred_region
      _
    $region57: #{dlgn_fc_bn_forward.1} parent=1 // pred_fallthru
      _
    // Predicated region
    $region58: #{dlgn_fc_bn_forward.1} parent=1 // pred_check
      _
    $region59: #{dlgn_fc_bn_forward.1} parent=1 // pred_check_branch
      %62 = sbr.rel (0) target = $region61
    $region60: #{dlgn_fc_bn_forward.1} parent=1 // pred_region
      _
    $region61: #{dlgn_fc_bn_forward.1} parent=1 // pred_fallthru
      _
    // Predicated region
    $region62: #{dlgn_fc_bn_forward.1} parent=1 // pred_check
      _
    $region63: #{dlgn_fc_bn_forward.1} parent=1 // pred_check_branch
      %64 = sbr.rel (0) target = $region65
    $region64: #{dlgn_fc_bn_forward.1} parent=1 // pred_region
      _
    $region65: #{dlgn_fc_bn_forward.1} parent=1 // pred_fallthru
      _
    // Predicated region
    $region66: #{dlgn_fc_bn_forward.1} parent=1 // pred_check
      _
    $region67: #{dlgn_fc_bn_forward.1} parent=1 // pred_check_branch
      %66 = sbr.rel (0) target = $region69
    $region68: #{dlgn_fc_bn_forward.1} parent=1 // pred_region
      _
    $region69: #{dlgn_fc_bn_forward.1} parent=1 // pred_fallthru
      _
    // Predicated region
    $region70: #{dlgn_fc_bn_forward.1} parent=1 // pred_check
      _
    $region71: #{dlgn_fc_bn_forward.1} parent=1 // pred_check_branch
      %68 = sbr.rel (0) target = $region73
    $region72: #{dlgn_fc_bn_forward.1} parent=1 // pred_region
      _
    $region73: #{dlgn_fc_bn_forward.1} parent=1 // pred_fallthru
      _
    // Predicated region
    $region74: #{dlgn_fc_bn_forward.1} parent=1 // pred_check
      _
    $region75: #{dlgn_fc_bn_forward.1} parent=1 // pred_check_branch
      %70 = sbr.rel (0) target = $region77
    $region76: #{dlgn_fc_bn_forward.1} parent=1 // pred_region
      _
    $region77: #{dlgn_fc_bn_forward.1} parent=1 // pred_fallthru
      _
    // Predicated region
    $region78: #{dlgn_fc_bn_forward.1} parent=1 // pred_check
      _
    $region79: #{dlgn_fc_bn_forward.1} parent=1 // pred_check_branch
      %72 = sbr.rel (0) target = $region81
    $region80: #{dlgn_fc_bn_forward.1} parent=1 // pred_region
      _
    $region81: #{dlgn_fc_bn_forward.1} parent=1 // pred_fallthru
      _
    // Predicated region
    $region82: #{dlgn_fc_bn_forward.1} parent=1 // pred_check
      _
    $region83: #{dlgn_fc_bn_forward.1} parent=1 // pred_check_branch
      %74 = sbr.rel (0) target = $region85
    $region84: #{dlgn_fc_bn_forward.1} parent=1 // pred_region
      _
    $region85: #{dlgn_fc_bn_forward.1} parent=1 // pred_fallthru
      _
    // Predicated region
    $region86: #{dlgn_fc_bn_forward.1} parent=1 // pred_check
      _
    $region87: #{dlgn_fc_bn_forward.1} parent=1 // pred_check_branch
      %76 = sbr.rel (0) target = $region89
    $region88: #{dlgn_fc_bn_forward.1} parent=1 // pred_region
      _
    $region89: #{dlgn_fc_bn_forward.1} parent=1 // pred_fallthru
      _
    // Predicated region
    $region90: #{dlgn_fc_bn_forward.1} parent=1 // pred_check
      _
    $region91: #{dlgn_fc_bn_forward.1} parent=1 // pred_check_branch
      %78 = sbr.rel (0) target = $region93
    $region92: #{dlgn_fc_bn_forward.1} parent=1 // pred_region
      _
    $region93: #{dlgn_fc_bn_forward.1} parent=1 // pred_fallthru
      _
    // Predicated region
    $region94: #{dlgn_fc_bn_forward.1} parent=1 // pred_check
      _
    $region95: #{dlgn_fc_bn_forward.1} parent=1 // pred_check_branch
      %80 = sbr.rel (0) target = $region97
    $region96: #{dlgn_fc_bn_forward.1} parent=1 // pred_region
      _
    $region97: #{dlgn_fc_bn_forward.1} parent=1 // pred_fallthru
      _
    // Predicated region
    $region98: #{dlgn_fc_bn_forward.1} parent=1 // pred_check
      _
    $region99: #{dlgn_fc_bn_forward.1} parent=1 // pred_check_branch
      %82 = sbr.rel (0) target = $region101
    $region100: #{dlgn_fc_bn_forward.1} parent=1 // pred_region
      _
    $region101: #{dlgn_fc_bn_forward.1} parent=1 // pred_fallthru
      _
    // Predicated region
    $region102: #{dlgn_fc_bn_forward.1} parent=1 // pred_check
      _
    $region103: #{dlgn_fc_bn_forward.1} parent=1 // pred_check_branch
      %84 = sbr.rel (0) target = $region105
    $region104: #{dlgn_fc_bn_forward.1} parent=1 // pred_region
      _
    $region105: #{dlgn_fc_bn_forward.1} parent=1 // pred_fallthru
      _
    // Predicated region
    $region106: #{dlgn_fc_bn_forward.1} parent=1 // pred_check
      _
    $region107: #{dlgn_fc_bn_forward.1} parent=1 // pred_check_branch
      %86 = sbr.rel (0) target = $region109
    $region108: #{dlgn_fc_bn_forward.1} parent=1 // pred_region
      _
    $region109: #{dlgn_fc_bn_forward.1} parent=1 // pred_fallthru
      _
    %v88 = vld [vmem:[%s0] sm:$0xff]
    %v89 = vld [vmem:[%s1] sm:$0xf]
    %v90 = vld [vmem:[%s1 + $0x4] sm:$0xf]
    %v91 = vld [vmem:[%s1 + $0x8] sm:$0xf]
    %v92 = vld [vmem:[%s1 + $0xc] sm:$0xf]
    %v93 = vld [vmem:[%s1 + $0x10] sm:$0xf]
    %v94 = vld [vmem:[%s1 + $0x14] sm:$0xf]
    %v95 = vld [vmem:[%s1 + $0x18] sm:$0xf]
    %v96 = vld [vmem:[%s1 + $0x1c] sm:$0xf]
    %v97 = vld [vmem:[%s1 + $0x20] sm:$0xf]
    %v98 = vld [vmem:[%s1 + $0x24] sm:$0xf]
    %v99 = vld [vmem:[%s1 + $0x28] sm:$0xf]
    %v100 = vld [vmem:[%s1 + $0x2c] sm:$0xf]
    %v101 = vld [vmem:[%s1 + $0x30] sm:$0xf]
    %v102 = vld [vmem:[%s1 + $0x34] sm:$0xf]
    %v103 = vld [vmem:[%s1 + $0x38] sm:$0xf]
    %v104 = vld [vmem:[%s1 + $0x3c] sm:$0xf]
    %v105 = vld [vmem:[%s1 + $0x40] sm:$0xf]
    %v106 = vld [vmem:[%s1 + $0x44] sm:$0xf]
    %v107 = vld [vmem:[%s1 + $0x48] sm:$0xf]
    %v108 = vld [vmem:[%s1 + $0x4c] sm:$0xf]
    %v109 = vld [vmem:[%s1 + $0x50] sm:$0xf]
    %v110 = vld [vmem:[%s1 + $0x54] sm:$0xf]
    %v111 = vld [vmem:[%s1 + $0x58] sm:$0xf]
    %v112 = vld [vmem:[%s1 + $0x5c] sm:$0xf]
    %v113 = vld [vmem:[%s1 + $0x60] sm:$0xf]
    %v114 = vld [vmem:[%s1 + $0x64] sm:$0xf]
    %v115 = vld [vmem:[%s1 + $0x68] sm:$0xf]
    %v116 = vld [vmem:[%s1 + $0x6c] sm:$0xf]
    %v117 = vld [vmem:[%s1 + $0x70] sm:$0xf]
    %v118 = vld [vmem:[%s1 + $0x74] sm:$0xf]
    %v119 = vld [vmem:[%s1 + $0x78] sm:$0xf]
    %v120 = vld [vmem:[%s1 + $0x7c] sm:$0xf]
    %v121 = vld [vmem:[%s1 + $0x80] sm:$0xf]
    %v122 = vld [vmem:[%s1 + $0x84] sm:$0xf]
    %v123 = vld [vmem:[%s1 + $0x88] sm:$0xf]
    %v124 = vld [vmem:[%s1 + $0x8c] sm:$0xf]
    %v125 = vld [vmem:[%s1 + $0x90] sm:$0xf]
    %v126 = vld [vmem:[%s1 + $0x94] sm:$0xf]
    %v127 = vld [vmem:[%s1 + $0x98] sm:$0xf]
    %v128 = vld [vmem:[%s1 + $0x9c] sm:$0xf]
    %v129 = vld [vmem:[%s1 + $0xa0] sm:$0xf]
    %v130 = vld [vmem:[%s1 + $0xa4] sm:$0xf]
    %v131 = vld [vmem:[%s1 + $0xa8] sm:$0xf]
    %v132 = vld [vmem:[%s1 + $0xac] sm:$0xf]
    %v133 = vld [vmem:[%s1 + $0xb0] sm:$0xf]
    %v134 = vld [vmem:[%s1 + $0xb4] sm:$0xf]
    %v135 = vld [vmem:[%s1 + $0xb8] sm:$0xf]
    %v136 = vld [vmem:[%s1 + $0xbc] sm:$0xf]
    %v137 = vld [vmem:[%s1 + $0xc0] sm:$0xf]
    %v138 = vld [vmem:[%s1 + $0xc4] sm:$0xf]
    %v139 = vld [vmem:[%s1 + $0xc8] sm:$0xf]
    %v140 = vld [vmem:[%s1 + $0xcc] sm:$0xf]
    %v141 = vld [vmem:[%s1 + $0xd0] sm:$0xf]
    %v142 = vld [vmem:[%s1 + $0xd4] sm:$0xf]
    %v143 = vld [vmem:[%s1 + $0xd8] sm:$0xf]
    %v144 = vld [vmem:[%s1 + $0xdc] sm:$0xf]
    %v145 = vld [vmem:[%s1 + $0xe0] sm:$0xf]
    %v146 = vld [vmem:[%s1 + $0xe4] sm:$0xf]
    %v147 = vld [vmem:[%s1 + $0xe8] sm:$0xf]
    %v148 = vld [vmem:[%s1 + $0xec] sm:$0xf]
    %v149 = vld [vmem:[%s1 + $0xf0] sm:$0xf]
    %v150 = vld [vmem:[%s1 + $0xf4] sm:$0xf]
    %v151 = vld [vmem:[%s1 + $0xf8] sm:$0xf]
    %v152 = vld [vmem:[%s1 + $0xfc] sm:$0xf]
    %v153 = vld [vmem:[%s1 + $0x100] sm:$0xf]
    %v154 = vld [vmem:[%s1 + $0x104] sm:$0xf]
    %v155 = vld [vmem:[%s1 + $0x108] sm:$0xf]
    %v156 = vld [vmem:[%s1 + $0x10c] sm:$0xf]
    %v157 = vld [vmem:[%s1 + $0x110] sm:$0xf]
    %v158 = vld [vmem:[%s1 + $0x114] sm:$0xf]
    %v159 = vld [vmem:[%s1 + $0x118] sm:$0xf]
    %v160 = vld [vmem:[%s1 + $0x11c] sm:$0xf]
    %v161 = vld [vmem:[%s1 + $0x120] sm:$0xf]
    %v162 = vld [vmem:[%s1 + $0x124] sm:$0xf]
    %v163 = vld [vmem:[%s1 + $0x128] sm:$0xf]
    %v164 = vld [vmem:[%s1 + $0x12c] sm:$0xf]
    %v165 = vld [vmem:[%s1 + $0x130] sm:$0xf]
    %v166 = vld [vmem:[%s1 + $0x134] sm:$0xf]
    %v167 = vld [vmem:[%s1 + $0x138] sm:$0xf]
    %v168 = vld [vmem:[%s1 + $0x13c] sm:$0xf]
    %v169 = vld [vmem:[%s1 + $0x140] sm:$0xf]
    %v170 = vld [vmem:[%s1 + $0x144] sm:$0xf]
    %v171 = vld [vmem:[%s1 + $0x148] sm:$0xf]
    %v172 = vld [vmem:[%s1 + $0x14c] sm:$0xf]
    %v173 = vld [vmem:[%s1 + $0x150] sm:$0xf]
    %v174 = vld [vmem:[%s1 + $0x154] sm:$0xf]
    %v175 = vld [vmem:[%s1 + $0x158] sm:$0xf]
    %v176 = vld [vmem:[%s1 + $0x15c] sm:$0xf]
    %v177 = vld [vmem:[%s1 + $0x160] sm:$0xf]
    %v178 = vld [vmem:[%s1 + $0x164] sm:$0xf]
    %v179 = vld [vmem:[%s1 + $0x168] sm:$0xf]
    %v180 = vld [vmem:[%s1 + $0x16c] sm:$0xf]
    %v181 = vld [vmem:[%s1 + $0x170] sm:$0xf]
    %v182 = vld [vmem:[%s1 + $0x174] sm:$0xf]
    %v183 = vld [vmem:[%s1 + $0x178] sm:$0xf]
    %v184 = vld [vmem:[%s1 + $0x17c] sm:$0xf]
    %v185 = vld [vmem:[%s1 + $0x180] sm:$0xf]
    %v186 = vld [vmem:[%s1 + $0x184] sm:$0xf]
    %v187 = vld [vmem:[%s1 + $0x188] sm:$0xf]
    %v188 = vld [vmem:[%s1 + $0x18c] sm:$0xf]
    %v189 = vld [vmem:[%s1 + $0x190] sm:$0xf]
    %v190 = vld [vmem:[%s1 + $0x194] sm:$0xf]
    %v191 = vld [vmem:[%s1 + $0x198] sm:$0xf]
    %v192 = vld [vmem:[%s1 + $0x19c] sm:$0xf]
    %v193 = vld [vmem:[%s1 + $0x1a0] sm:$0xf]
    %v194 = vld [vmem:[%s1 + $0x1a4] sm:$0xf]
    %v195 = vld [vmem:[%s1 + $0x1a8] sm:$0xf]
    %v196 = vld [vmem:[%s1 + $0x1ac] sm:$0xf]
    %v197 = vld [vmem:[%s1 + $0x1b0] sm:$0xf]
    %v198 = vld [vmem:[%s1 + $0x1b4] sm:$0xf]
    %v199 = vld [vmem:[%s1 + $0x1b8] sm:$0xf]
    %v200 = vld [vmem:[%s1 + $0x1bc] sm:$0xf]
    %v201 = vld [vmem:[%s1 + $0x1c0] sm:$0xf]
    %v202 = vld [vmem:[%s1 + $0x1c4] sm:$0xf]
    %v203 = vld [vmem:[%s1 + $0x1c8] sm:$0xf]
    %v204 = vld [vmem:[%s1 + $0x1cc] sm:$0xf]
    %v205 = vld [vmem:[%s1 + $0x1d0] sm:$0xf]
    %v206 = vld [vmem:[%s1 + $0x1d4] sm:$0xf]
    %v207 = vld [vmem:[%s1 + $0x1d8] sm:$0xf]
    %v208 = vld [vmem:[%s1 + $0x1dc] sm:$0xf]
    %v209 = vld [vmem:[%s1 + $0x1e0] sm:$0xf]
    %v210 = vld [vmem:[%s1 + $0x1e4] sm:$0xf]
    %v211 = vld [vmem:[%s1 + $0x1e8] sm:$0xf]
    %v212 = vld [vmem:[%s1 + $0x1ec] sm:$0xf]
    %v213 = vld [vmem:[%s1 + $0x1f0] sm:$0xf]
    %v214 = vld [vmem:[%s1 + $0x1f4] sm:$0xf]
    %v215 = vld [vmem:[%s1 + $0x1f8] sm:$0xf]
    %v216 = vld [vmem:[%s1 + $0x1fc] sm:$0xf]
    %v217 = vld [vmem:[%s2] sm:$0x1]
    %v219 = vlaneseq
    %v220 = vshrl.u32 %v219, 7
    %v221 = vsub.s32 0, %v220
    %v222 = vrot.slane %v217, %v221
    %v225 = vcombine.high %v88, %v88
    %v227 = vunpack.c.l.s4 1966171168
    %v228 = vunpack.c.0.s8 %v227
    %v229 = vlaneseq
    %v230 = vshrl.u32 %v229, 7
    %v231 = vsub.s32 %v228, %v230
    %v232 = vrot.slane %v88, %v231
    %v234 = vunpack.c.l.s4 1966171168
    %v235 = vunpack.c.0.s8 %v234
    %v236 = vlaneseq
    %v237 = vshrl.u32 %v236, 7
    %v238 = vsub.s32 %v235, %v237
    %v239 = vrot.slane %v225, %v238
    %v240 = vcombine.high %v232, %v232
    %v241 = vcombine.high %v239, %v239
    %v243 = vunpack.c.l.s4 1966171168
    %v244 = vunpack.c.0.s8 %v243
    %v245 = vlaneseq
    %v246 = vshrl.u32 %v245, 7
    %v247 = vsub.s32 %v244, %v246
    %v248 = vrot.slane %v232, %v247
    %v250 = vunpack.c.l.s4 1966171168
    %v251 = vunpack.c.0.s8 %v250
    %v252 = vlaneseq
    %v253 = vshrl.u32 %v252, 7
    %v254 = vsub.s32 %v251, %v253
    %v255 = vrot.slane %v239, %v254
    %v257 = vunpack.c.l.s4 1966171168
    %v258 = vunpack.c.0.s8 %v257
    %v259 = vlaneseq
    %v260 = vshrl.u32 %v259, 7
    %v261 = vsub.s32 %v258, %v260
    %v262 = vrot.slane %v240, %v261
    %v264 = vunpack.c.l.s4 1966171168
    %v265 = vunpack.c.0.s8 %v264
    %v266 = vlaneseq
    %v267 = vshrl.u32 %v266, 7
    %v268 = vsub.s32 %v265, %v267
    %v269 = vrot.slane %v241, %v268
    %v270 = vcombine.high %v248, %v248
    %v271 = vcombine.high %v255, %v255
    %v272 = vcombine.high %v262, %v262
    %v273 = vcombine.high %v269, %v269
    %v410 = vunpack.c.l.b16 %v89
    %v411 = vunpack.c.l.b16 %v90
    %v412 = vunpack.c.l.b16 %v91
    %v413 = vunpack.c.l.b16 %v92
    %v414 = vunpack.c.l.b16 %v93
    %v415 = vunpack.c.l.b16 %v94
    %v416 = vunpack.c.l.b16 %v95
    %v417 = vunpack.c.l.b16 %v96
    %v418 = vunpack.c.l.b16 %v97
    %v419 = vunpack.c.l.b16 %v98
    %v420 = vunpack.c.l.b16 %v99
    %v421 = vunpack.c.l.b16 %v100
    %v422 = vunpack.c.l.b16 %v101
    %v423 = vunpack.c.l.b16 %v102
    %v424 = vunpack.c.l.b16 %v103
    %v425 = vunpack.c.l.b16 %v104
    %v426 = vunpack.c.l.b16 %v105
    %v427 = vunpack.c.l.b16 %v106
    %v428 = vunpack.c.l.b16 %v107
    %v429 = vunpack.c.l.b16 %v108
    %v430 = vunpack.c.l.b16 %v109
    %v431 = vunpack.c.l.b16 %v110
    %v432 = vunpack.c.l.b16 %v111
    %v433 = vunpack.c.l.b16 %v112
    %v434 = vunpack.c.l.b16 %v113
    %v435 = vunpack.c.l.b16 %v114
    %v436 = vunpack.c.l.b16 %v115
    %v437 = vunpack.c.l.b16 %v116
    %v438 = vunpack.c.l.b16 %v117
    %v439 = vunpack.c.l.b16 %v118
    %v440 = vunpack.c.l.b16 %v119
    %v441 = vunpack.c.l.b16 %v120
    %v442 = vunpack.c.l.b16 %v121
    %v443 = vunpack.c.l.b16 %v122
    %v444 = vunpack.c.l.b16 %v123
    %v445 = vunpack.c.l.b16 %v124
    %v446 = vunpack.c.l.b16 %v125
    %v447 = vunpack.c.l.b16 %v126
    %v448 = vunpack.c.l.b16 %v127
    %v449 = vunpack.c.l.b16 %v128
    %v450 = vunpack.c.l.b16 %v129
    %v451 = vunpack.c.l.b16 %v130
    %v452 = vunpack.c.l.b16 %v131
    %v453 = vunpack.c.l.b16 %v132
    %v454 = vunpack.c.l.b16 %v133
    %v455 = vunpack.c.l.b16 %v134
    %v456 = vunpack.c.l.b16 %v135
    %v457 = vunpack.c.l.b16 %v136
    %v458 = vunpack.c.l.b16 %v137
    %v459 = vunpack.c.l.b16 %v138
    %v460 = vunpack.c.l.b16 %v139
    %v461 = vunpack.c.l.b16 %v140
    %v462 = vunpack.c.l.b16 %v141
    %v463 = vunpack.c.l.b16 %v142
    %v464 = vunpack.c.l.b16 %v143
    %v465 = vunpack.c.l.b16 %v144
    %v466 = vunpack.c.l.b16 %v145
    %v467 = vunpack.c.l.b16 %v146
    %v468 = vunpack.c.l.b16 %v147
    %v469 = vunpack.c.l.b16 %v148
    %v470 = vunpack.c.l.b16 %v149
    %v471 = vunpack.c.l.b16 %v150
    %v472 = vunpack.c.l.b16 %v151
    %v473 = vunpack.c.l.b16 %v152
    %v474 = vunpack.c.l.b16 %v153
    %v475 = vunpack.c.l.b16 %v154
    %v476 = vunpack.c.l.b16 %v155
    %v477 = vunpack.c.l.b16 %v156
    %v478 = vunpack.c.l.b16 %v157
    %v479 = vunpack.c.l.b16 %v158
    %v480 = vunpack.c.l.b16 %v159
    %v481 = vunpack.c.l.b16 %v160
    %v482 = vunpack.c.l.b16 %v161
    %v483 = vunpack.c.l.b16 %v162
    %v484 = vunpack.c.l.b16 %v163
    %v485 = vunpack.c.l.b16 %v164
    %v486 = vunpack.c.l.b16 %v165
    %v487 = vunpack.c.l.b16 %v166
    %v488 = vunpack.c.l.b16 %v167
    %v489 = vunpack.c.l.b16 %v168
    %v490 = vunpack.c.l.b16 %v169
    %v491 = vunpack.c.l.b16 %v170
    %v492 = vunpack.c.l.b16 %v171
    %v493 = vunpack.c.l.b16 %v172
    %v494 = vunpack.c.l.b16 %v173
    %v495 = vunpack.c.l.b16 %v174
    %v496 = vunpack.c.l.b16 %v175
    %v497 = vunpack.c.l.b16 %v176
    %v498 = vunpack.c.l.b16 %v177
    %v499 = vunpack.c.l.b16 %v178
    %v500 = vunpack.c.l.b16 %v179
    %v501 = vunpack.c.l.b16 %v180
    %v502 = vunpack.c.l.b16 %v181
    %v503 = vunpack.c.l.b16 %v182
    %v504 = vunpack.c.l.b16 %v183
    %v505 = vunpack.c.l.b16 %v184
    %v506 = vunpack.c.l.b16 %v185
    %v507 = vunpack.c.l.b16 %v186
    %v508 = vunpack.c.l.b16 %v187
    %v509 = vunpack.c.l.b16 %v188
    %v510 = vunpack.c.l.b16 %v189
    %v511 = vunpack.c.l.b16 %v190
    %v512 = vunpack.c.l.b16 %v191
    %v513 = vunpack.c.l.b16 %v192
    %v514 = vunpack.c.l.b16 %v193
    %v515 = vunpack.c.l.b16 %v194
    %v516 = vunpack.c.l.b16 %v195
    %v517 = vunpack.c.l.b16 %v196
    %v518 = vunpack.c.l.b16 %v197
    %v519 = vunpack.c.l.b16 %v198
    %v520 = vunpack.c.l.b16 %v199
    %v521 = vunpack.c.l.b16 %v200
    %v522 = vunpack.c.l.b16 %v201
    %v523 = vunpack.c.l.b16 %v202
    %v524 = vunpack.c.l.b16 %v203
    %v525 = vunpack.c.l.b16 %v204
    %v526 = vunpack.c.l.b16 %v205
    %v527 = vunpack.c.l.b16 %v206
    %v528 = vunpack.c.l.b16 %v207
    %v529 = vunpack.c.l.b16 %v208
    %v530 = vunpack.c.l.b16 %v209
    %v531 = vunpack.c.l.b16 %v210
    %v532 = vunpack.c.l.b16 %v211
    %v533 = vunpack.c.l.b16 %v212
    %v534 = vunpack.c.l.b16 %v213
    %v535 = vunpack.c.l.b16 %v214
    %v536 = vunpack.c.l.b16 %v215
    %v537 = vunpack.c.l.b16 %v216
    %v538 = vpack.c.b16 %v411, %v410
    %v539 = vpack.c.b16 %v413, %v412
    %v540 = vpack.c.b16 %v415, %v414
    %v541 = vpack.c.b16 %v417, %v416
    %v542 = vpack.c.b16 %v419, %v418
    %v543 = vpack.c.b16 %v421, %v420
    %v544 = vpack.c.b16 %v423, %v422
    %v545 = vpack.c.b16 %v425, %v424
    %v546 = vpack.c.b16 %v427, %v426
    %v547 = vpack.c.b16 %v429, %v428
    %v548 = vpack.c.b16 %v431, %v430
    %v549 = vpack.c.b16 %v433, %v432
    %v550 = vpack.c.b16 %v435, %v434
    %v551 = vpack.c.b16 %v437, %v436
    %v552 = vpack.c.b16 %v439, %v438
    %v553 = vpack.c.b16 %v441, %v440
    %v554 = vpack.c.b16 %v443, %v442
    %v555 = vpack.c.b16 %v445, %v444
    %v556 = vpack.c.b16 %v447, %v446
    %v557 = vpack.c.b16 %v449, %v448
    %v558 = vpack.c.b16 %v451, %v450
    %v559 = vpack.c.b16 %v453, %v452
    %v560 = vpack.c.b16 %v455, %v454
    %v561 = vpack.c.b16 %v457, %v456
    %v562 = vpack.c.b16 %v459, %v458
    %v563 = vpack.c.b16 %v461, %v460
    %v564 = vpack.c.b16 %v463, %v462
    %v565 = vpack.c.b16 %v465, %v464
    %v566 = vpack.c.b16 %v467, %v466
    %v567 = vpack.c.b16 %v469, %v468
    %v568 = vpack.c.b16 %v471, %v470
    %v569 = vpack.c.b16 %v473, %v472
    %v570 = vpack.c.b16 %v475, %v474
    %v571 = vpack.c.b16 %v477, %v476
    %v572 = vpack.c.b16 %v479, %v478
    %v573 = vpack.c.b16 %v481, %v480
    %v574 = vpack.c.b16 %v483, %v482
    %v575 = vpack.c.b16 %v485, %v484
    %v576 = vpack.c.b16 %v487, %v486
    %v577 = vpack.c.b16 %v489, %v488
    %v578 = vpack.c.b16 %v491, %v490
    %v579 = vpack.c.b16 %v493, %v492
    %v580 = vpack.c.b16 %v495, %v494
    %v581 = vpack.c.b16 %v497, %v496
    %v582 = vpack.c.b16 %v499, %v498
    %v583 = vpack.c.b16 %v501, %v500
    %v584 = vpack.c.b16 %v503, %v502
    %v585 = vpack.c.b16 %v505, %v504
    %v586 = vpack.c.b16 %v507, %v506
    %v587 = vpack.c.b16 %v509, %v508
    %v588 = vpack.c.b16 %v511, %v510
    %v589 = vpack.c.b16 %v513, %v512
    %v590 = vpack.c.b16 %v515, %v514
    %v591 = vpack.c.b16 %v517, %v516
    %v592 = vpack.c.b16 %v519, %v518
    %v593 = vpack.c.b16 %v521, %v520
    %v594 = vpack.c.b16 %v523, %v522
    %v595 = vpack.c.b16 %v525, %v524
    %v596 = vpack.c.b16 %v527, %v526
    %v597 = vpack.c.b16 %v529, %v528
    %v598 = vpack.c.b16 %v531, %v530
    %v599 = vpack.c.b16 %v533, %v532
    %v600 = vpack.c.b16 %v535, %v534
    %v601 = vpack.c.b16 %v537, %v536
    %666 = vmatprep.subr.bf16.mxu0 0
    %667 = vmatpush1.bf16.msra.mxu0 %v545
    %668 = vmatprep.subr.bf16.mxu0 0
    %669 = vmatpush1.bf16.msra.mxu0 %v544
    %670 = vmatprep.subr.bf16.mxu0 0
    %671 = vmatpush1.bf16.msra.mxu0 %v543
    %672 = vmatprep.subr.bf16.mxu0 0
    %673 = vmatpush1.bf16.msra.mxu0 %v542
    %674 = vmatprep.subr.bf16.mxu0 0
    %675 = vmatpush1.bf16.msra.mxu0 %v541
    %676 = vmatprep.subr.bf16.mxu0 0
    %677 = vmatpush1.bf16.msra.mxu0 %v540
    %678 = vmatprep.subr.bf16.mxu0 0
    %679 = vmatpush1.bf16.msra.mxu0 %v539
    %680 = vmatprep.subr.bf16.mxu0 0
    %681 = vmatpush1.bf16.msra.mxu0 %v538
    %682 = vmatprep.subr.bf16.mxu0 0
    %683 = vmatpush2.bf16.msra.mxu0 %v553
    %684 = vmatprep.subr.bf16.mxu0 0
    %685 = vmatpush2.bf16.msra.mxu0 %v552
    %686 = vmatprep.subr.bf16.mxu0 0
    %687 = vmatpush2.bf16.msra.mxu0 %v551
    %688 = vmatprep.subr.bf16.mxu0 0
    %689 = vmatpush2.bf16.msra.mxu0 %v550
    %690 = vmatprep.subr.bf16.mxu0 0
    %691 = vmatpush2.bf16.msra.mxu0 %v549
    %692 = vmatprep.subr.bf16.mxu0 0
    %693 = vmatpush2.bf16.msra.mxu0 %v548
    %694 = vmatprep.subr.bf16.mxu0 0
    %695 = vmatpush2.bf16.msra.mxu0 %v547
    %696 = vmatprep.subr.bf16.mxu0 0
    %697 = vmatpush2.bf16.msra.mxu0 %v546
    %698 = vmatprep.mubr.bf16.mxu0 %v262
    %699 = vmatmul.mubr.bf16.gmra.mxu0 %v248
    %v700 = vpop.f32.mrf.mxu0
    %v701 = vadd.f32 %v222, %v700
    %v702 = vpop.f32.mrf.mxu0
    %v703 = vpop.f32.mrf.mxu0
    %v704 = vpop.f32.mrf.mxu0
    %705 = vdwg.mxu0
    %706 = vmatprep.subr.bf16.mxu0 0
    %707 = vmatpush1.bf16.msra.mxu0 %v561
    %708 = vmatprep.subr.bf16.mxu0 0
    %709 = vmatpush1.bf16.msra.mxu0 %v560
    %710 = vmatprep.subr.bf16.mxu0 0
    %711 = vmatpush1.bf16.msra.mxu0 %v559
    %712 = vmatprep.subr.bf16.mxu0 0
    %713 = vmatpush1.bf16.msra.mxu0 %v558
    %714 = vmatprep.subr.bf16.mxu0 0
    %715 = vmatpush1.bf16.msra.mxu0 %v557
    %716 = vmatprep.subr.bf16.mxu0 0
    %717 = vmatpush1.bf16.msra.mxu0 %v556
    %718 = vmatprep.subr.bf16.mxu0 0
    %719 = vmatpush1.bf16.msra.mxu0 %v555
    %720 = vmatprep.subr.bf16.mxu0 0
    %721 = vmatpush1.bf16.msra.mxu0 %v554
    %722 = vmatprep.subr.bf16.mxu0 0
    %723 = vmatpush2.bf16.msra.mxu0 %v569
    %724 = vmatprep.subr.bf16.mxu0 0
    %725 = vmatpush2.bf16.msra.mxu0 %v568
    %726 = vmatprep.subr.bf16.mxu0 0
    %727 = vmatpush2.bf16.msra.mxu0 %v567
    %728 = vmatprep.subr.bf16.mxu0 0
    %729 = vmatpush2.bf16.msra.mxu0 %v566
    %730 = vmatprep.subr.bf16.mxu0 0
    %731 = vmatpush2.bf16.msra.mxu0 %v565
    %732 = vmatprep.subr.bf16.mxu0 0
    %733 = vmatpush2.bf16.msra.mxu0 %v564
    %734 = vmatprep.subr.bf16.mxu0 0
    %735 = vmatpush2.bf16.msra.mxu0 %v563
    %736 = vmatprep.subr.bf16.mxu0 0
    %737 = vmatpush2.bf16.msra.mxu0 %v562
    %738 = vmatprep.mubr.bf16.mxu0 %v272
    %739 = vmatmul.mubr.bf16.gmra.mxu0 %v270
    %v740 = vpop.f32.mrf.mxu0
    %v741 = vadd.f32 %v701, %v740
    %v742 = vpop.f32.mrf.mxu0
    %v743 = vpop.f32.mrf.mxu0
    %v744 = vpop.f32.mrf.mxu0
    %745 = vdwg.mxu0
    %746 = vmatprep.subr.bf16.mxu0 0
    %747 = vmatpush1.bf16.msra.mxu0 %v577
    %748 = vmatprep.subr.bf16.mxu0 0
    %749 = vmatpush1.bf16.msra.mxu0 %v576
    %750 = vmatprep.subr.bf16.mxu0 0
    %751 = vmatpush1.bf16.msra.mxu0 %v575
    %752 = vmatprep.subr.bf16.mxu0 0
    %753 = vmatpush1.bf16.msra.mxu0 %v574
    %754 = vmatprep.subr.bf16.mxu0 0
    %755 = vmatpush1.bf16.msra.mxu0 %v573
    %756 = vmatprep.subr.bf16.mxu0 0
    %757 = vmatpush1.bf16.msra.mxu0 %v572
    %758 = vmatprep.subr.bf16.mxu0 0
    %759 = vmatpush1.bf16.msra.mxu0 %v571
    %760 = vmatprep.subr.bf16.mxu0 0
    %761 = vmatpush1.bf16.msra.mxu0 %v570
    %762 = vmatprep.subr.bf16.mxu0 0
    %763 = vmatpush2.bf16.msra.mxu0 %v585
    %764 = vmatprep.subr.bf16.mxu0 0
    %765 = vmatpush2.bf16.msra.mxu0 %v584
    %766 = vmatprep.subr.bf16.mxu0 0
    %767 = vmatpush2.bf16.msra.mxu0 %v583
    %768 = vmatprep.subr.bf16.mxu0 0
    %769 = vmatpush2.bf16.msra.mxu0 %v582
    %770 = vmatprep.subr.bf16.mxu0 0
    %771 = vmatpush2.bf16.msra.mxu0 %v581
    %772 = vmatprep.subr.bf16.mxu0 0
    %773 = vmatpush2.bf16.msra.mxu0 %v580
    %774 = vmatprep.subr.bf16.mxu0 0
    %775 = vmatpush2.bf16.msra.mxu0 %v579
    %776 = vmatprep.subr.bf16.mxu0 0
    %777 = vmatpush2.bf16.msra.mxu0 %v578
    %778 = vmatprep.mubr.bf16.mxu0 %v269
    %779 = vmatmul.mubr.bf16.gmra.mxu0 %v255
    %v780 = vpop.f32.mrf.mxu0
    %v781 = vadd.f32 %v741, %v780
    %v782 = vpop.f32.mrf.mxu0
    %v783 = vpop.f32.mrf.mxu0
    %v784 = vpop.f32.mrf.mxu0
    %785 = vdwg.mxu0
    %786 = vmatprep.subr.bf16.mxu0 0
    %787 = vmatpush1.bf16.msra.mxu0 %v593
    %788 = vmatprep.subr.bf16.mxu0 0
    %789 = vmatpush1.bf16.msra.mxu0 %v592
    %790 = vmatprep.subr.bf16.mxu0 0
    %791 = vmatpush1.bf16.msra.mxu0 %v591
    %792 = vmatprep.subr.bf16.mxu0 0
    %793 = vmatpush1.bf16.msra.mxu0 %v590
    %794 = vmatprep.subr.bf16.mxu0 0
    %795 = vmatpush1.bf16.msra.mxu0 %v589
    %796 = vmatprep.subr.bf16.mxu0 0
    %797 = vmatpush1.bf16.msra.mxu0 %v588
    %798 = vmatprep.subr.bf16.mxu0 0
    %799 = vmatpush1.bf16.msra.mxu0 %v587
    %800 = vmatprep.subr.bf16.mxu0 0
    %801 = vmatpush1.bf16.msra.mxu0 %v586
    %802 = vmatprep.subr.bf16.mxu0 0
    %803 = vmatpush2.bf16.msra.mxu0 %v601
    %804 = vmatprep.subr.bf16.mxu0 0
    %805 = vmatpush2.bf16.msra.mxu0 %v600
    %806 = vmatprep.subr.bf16.mxu0 0
    %807 = vmatpush2.bf16.msra.mxu0 %v599
    %808 = vmatprep.subr.bf16.mxu0 0
    %809 = vmatpush2.bf16.msra.mxu0 %v598
    %810 = vmatprep.subr.bf16.mxu0 0
    %811 = vmatpush2.bf16.msra.mxu0 %v597
    %812 = vmatprep.subr.bf16.mxu0 0
    %813 = vmatpush2.bf16.msra.mxu0 %v596
    %814 = vmatprep.subr.bf16.mxu0 0
    %815 = vmatpush2.bf16.msra.mxu0 %v595
    %816 = vmatprep.subr.bf16.mxu0 0
    %817 = vmatpush2.bf16.msra.mxu0 %v594
    %818 = vmatprep.mubr.bf16.mxu0 %v273
    %819 = vmatmul.mubr.bf16.gmra.mxu0 %v271
    %v820 = vpop.f32.mrf.mxu0
    %v821 = vadd.f32 %v781, %v820
    %v822 = vpop.f32.mrf.mxu0
    %v823 = vpop.f32.mrf.mxu0
    %v824 = vpop.f32.mrf.mxu0
    %825 = vdwg.mxu0
    %v826 = vld [vmem:[%s3] sm:$0x1]
    %v828 = vlaneseq
    %v829 = vshrl.u32 %v828, 7
    %v830 = vsub.s32 0, %v829
    %v831 = vrot.slane %v826, %v830
    %v833 = vmul.f32 %v821, %v831
    %v834 = vld [vmem:[%s4] sm:$0x1]
    %v836 = vlaneseq
    %v837 = vshrl.u32 %v836, 7
    %v838 = vsub.s32 0, %v837
    %v839 = vrot.slane %v834, %v838
    %v841 = vadd.f32 %v833, %v839
    %v842 = vmul.f32 %v821, -4.0
    %v843 = vmul.f32 %v842, 1.442695
    %v844 = vpow.pop %v843
    %v845 = vadd.f32 %v844, 1.0
    %v846 = vrcp.pop %v845
    %v847 = vmul.f32 1.0, %v846
    %v848 = vmul.f32 %v841, -4.0
    %v849 = vmul.f32 %v848, 1.442695
    %v850 = vpow.pop %v849
    %v851 = vadd.f32 %v850, 1.0
    %v852 = vrcp.pop %v851
    %v853 = vmul.f32 1.0, %v852
    %v854 = vld [vmem:[%s5] sm:$0xf]
    %v855 = vld [vmem:[%s5 + $0x4] sm:$0xf]
    %v856 = vld [vmem:[%s5 + $0x8] sm:$0xf]
    %v857 = vld [vmem:[%s5 + $0xc] sm:$0xf]
    %v858 = vld [vmem:[%s5 + $0x10] sm:$0xf]
    %v859 = vld [vmem:[%s5 + $0x14] sm:$0xf]
    %v860 = vld [vmem:[%s5 + $0x18] sm:$0xf]
    %v861 = vld [vmem:[%s5 + $0x1c] sm:$0xf]
    %v862 = vld [vmem:[%s5 + $0x20] sm:$0xf]
    %v863 = vld [vmem:[%s5 + $0x24] sm:$0xf]
    %v864 = vld [vmem:[%s5 + $0x28] sm:$0xf]
    %v865 = vld [vmem:[%s5 + $0x2c] sm:$0xf]
    %v866 = vld [vmem:[%s5 + $0x30] sm:$0xf]
    %v867 = vld [vmem:[%s5 + $0x34] sm:$0xf]
    %v868 = vld [vmem:[%s5 + $0x38] sm:$0xf]
    %v869 = vld [vmem:[%s5 + $0x3c] sm:$0xf]
    %v870 = vld [vmem:[%s5 + $0x40] sm:$0xf]
    %v871 = vld [vmem:[%s5 + $0x44] sm:$0xf]
    %v872 = vld [vmem:[%s5 + $0x48] sm:$0xf]
    %v873 = vld [vmem:[%s5 + $0x4c] sm:$0xf]
    %v874 = vld [vmem:[%s5 + $0x50] sm:$0xf]
    %v875 = vld [vmem:[%s5 + $0x54] sm:$0xf]
    %v876 = vld [vmem:[%s5 + $0x58] sm:$0xf]
    %v877 = vld [vmem:[%s5 + $0x5c] sm:$0xf]
    %v878 = vld [vmem:[%s5 + $0x60] sm:$0xf]
    %v879 = vld [vmem:[%s5 + $0x64] sm:$0xf]
    %v880 = vld [vmem:[%s5 + $0x68] sm:$0xf]
    %v881 = vld [vmem:[%s5 + $0x6c] sm:$0xf]
    %v882 = vld [vmem:[%s5 + $0x70] sm:$0xf]
    %v883 = vld [vmem:[%s5 + $0x74] sm:$0xf]
    %v884 = vld [vmem:[%s5 + $0x78] sm:$0xf]
    %v885 = vld [vmem:[%s5 + $0x7c] sm:$0xf]
    %v886 = vld [vmem:[%s5 + $0x80] sm:$0xf]
    %v887 = vld [vmem:[%s5 + $0x84] sm:$0xf]
    %v888 = vld [vmem:[%s5 + $0x88] sm:$0xf]
    %v889 = vld [vmem:[%s5 + $0x8c] sm:$0xf]
    %v890 = vld [vmem:[%s5 + $0x90] sm:$0xf]
    %v891 = vld [vmem:[%s5 + $0x94] sm:$0xf]
    %v892 = vld [vmem:[%s5 + $0x98] sm:$0xf]
    %v893 = vld [vmem:[%s5 + $0x9c] sm:$0xf]
    %v894 = vld [vmem:[%s5 + $0xa0] sm:$0xf]
    %v895 = vld [vmem:[%s5 + $0xa4] sm:$0xf]
    %v896 = vld [vmem:[%s5 + $0xa8] sm:$0xf]
    %v897 = vld [vmem:[%s5 + $0xac] sm:$0xf]
    %v898 = vld [vmem:[%s5 + $0xb0] sm:$0xf]
    %v899 = vld [vmem:[%s5 + $0xb4] sm:$0xf]
    %v900 = vld [vmem:[%s5 + $0xb8] sm:$0xf]
    %v901 = vld [vmem:[%s5 + $0xbc] sm:$0xf]
    %v902 = vld [vmem:[%s5 + $0xc0] sm:$0xf]
    %v903 = vld [vmem:[%s5 + $0xc4] sm:$0xf]
    %v904 = vld [vmem:[%s5 + $0xc8] sm:$0xf]
    %v905 = vld [vmem:[%s5 + $0xcc] sm:$0xf]
    %v906 = vld [vmem:[%s5 + $0xd0] sm:$0xf]
    %v907 = vld [vmem:[%s5 + $0xd4] sm:$0xf]
    %v908 = vld [vmem:[%s5 + $0xd8] sm:$0xf]
    %v909 = vld [vmem:[%s5 + $0xdc] sm:$0xf]
    %v910 = vld [vmem:[%s5 + $0xe0] sm:$0xf]
    %v911 = vld [vmem:[%s5 + $0xe4] sm:$0xf]
    %v912 = vld [vmem:[%s5 + $0xe8] sm:$0xf]
    %v913 = vld [vmem:[%s5 + $0xec] sm:$0xf]
    %v914 = vld [vmem:[%s5 + $0xf0] sm:$0xf]
    %v915 = vld [vmem:[%s5 + $0xf4] sm:$0xf]
    %v916 = vld [vmem:[%s5 + $0xf8] sm:$0xf]
    %v917 = vld [vmem:[%s5 + $0xfc] sm:$0xf]
    %v918 = vld [vmem:[%s5 + $0x100] sm:$0xf]
    %v919 = vld [vmem:[%s5 + $0x104] sm:$0xf]
    %v920 = vld [vmem:[%s5 + $0x108] sm:$0xf]
    %v921 = vld [vmem:[%s5 + $0x10c] sm:$0xf]
    %v922 = vld [vmem:[%s5 + $0x110] sm:$0xf]
    %v923 = vld [vmem:[%s5 + $0x114] sm:$0xf]
    %v924 = vld [vmem:[%s5 + $0x118] sm:$0xf]
    %v925 = vld [vmem:[%s5 + $0x11c] sm:$0xf]
    %v926 = vld [vmem:[%s5 + $0x120] sm:$0xf]
    %v927 = vld [vmem:[%s5 + $0x124] sm:$0xf]
    %v928 = vld [vmem:[%s5 + $0x128] sm:$0xf]
    %v929 = vld [vmem:[%s5 + $0x12c] sm:$0xf]
    %v930 = vld [vmem:[%s5 + $0x130] sm:$0xf]
    %v931 = vld [vmem:[%s5 + $0x134] sm:$0xf]
    %v932 = vld [vmem:[%s5 + $0x138] sm:$0xf]
    %v933 = vld [vmem:[%s5 + $0x13c] sm:$0xf]
    %v934 = vld [vmem:[%s5 + $0x140] sm:$0xf]
    %v935 = vld [vmem:[%s5 + $0x144] sm:$0xf]
    %v936 = vld [vmem:[%s5 + $0x148] sm:$0xf]
    %v937 = vld [vmem:[%s5 + $0x14c] sm:$0xf]
    %v938 = vld [vmem:[%s5 + $0x150] sm:$0xf]
    %v939 = vld [vmem:[%s5 + $0x154] sm:$0xf]
    %v940 = vld [vmem:[%s5 + $0x158] sm:$0xf]
    %v941 = vld [vmem:[%s5 + $0x15c] sm:$0xf]
    %v942 = vld [vmem:[%s5 + $0x160] sm:$0xf]
    %v943 = vld [vmem:[%s5 + $0x164] sm:$0xf]
    %v944 = vld [vmem:[%s5 + $0x168] sm:$0xf]
    %v945 = vld [vmem:[%s5 + $0x16c] sm:$0xf]
    %v946 = vld [vmem:[%s5 + $0x170] sm:$0xf]
    %v947 = vld [vmem:[%s5 + $0x174] sm:$0xf]
    %v948 = vld [vmem:[%s5 + $0x178] sm:$0xf]
    %v949 = vld [vmem:[%s5 + $0x17c] sm:$0xf]
    %v950 = vld [vmem:[%s5 + $0x180] sm:$0xf]
    %v951 = vld [vmem:[%s5 + $0x184] sm:$0xf]
    %v952 = vld [vmem:[%s5 + $0x188] sm:$0xf]
    %v953 = vld [vmem:[%s5 + $0x18c] sm:$0xf]
    %v954 = vld [vmem:[%s5 + $0x190] sm:$0xf]
    %v955 = vld [vmem:[%s5 + $0x194] sm:$0xf]
    %v956 = vld [vmem:[%s5 + $0x198] sm:$0xf]
    %v957 = vld [vmem:[%s5 + $0x19c] sm:$0xf]
    %v958 = vld [vmem:[%s5 + $0x1a0] sm:$0xf]
    %v959 = vld [vmem:[%s5 + $0x1a4] sm:$0xf]
    %v960 = vld [vmem:[%s5 + $0x1a8] sm:$0xf]
    %v961 = vld [vmem:[%s5 + $0x1ac] sm:$0xf]
    %v962 = vld [vmem:[%s5 + $0x1b0] sm:$0xf]
    %v963 = vld [vmem:[%s5 + $0x1b4] sm:$0xf]
    %v964 = vld [vmem:[%s5 + $0x1b8] sm:$0xf]
    %v965 = vld [vmem:[%s5 + $0x1bc] sm:$0xf]
    %v966 = vld [vmem:[%s5 + $0x1c0] sm:$0xf]
    %v967 = vld [vmem:[%s5 + $0x1c4] sm:$0xf]
    %v968 = vld [vmem:[%s5 + $0x1c8] sm:$0xf]
    %v969 = vld [vmem:[%s5 + $0x1cc] sm:$0xf]
    %v970 = vld [vmem:[%s5 + $0x1d0] sm:$0xf]
    %v971 = vld [vmem:[%s5 + $0x1d4] sm:$0xf]
    %v972 = vld [vmem:[%s5 + $0x1d8] sm:$0xf]
    %v973 = vld [vmem:[%s5 + $0x1dc] sm:$0xf]
    %v974 = vld [vmem:[%s5 + $0x1e0] sm:$0xf]
    %v975 = vld [vmem:[%s5 + $0x1e4] sm:$0xf]
    %v976 = vld [vmem:[%s5 + $0x1e8] sm:$0xf]
    %v977 = vld [vmem:[%s5 + $0x1ec] sm:$0xf]
    %v978 = vld [vmem:[%s5 + $0x1f0] sm:$0xf]
    %v979 = vld [vmem:[%s5 + $0x1f4] sm:$0xf]
    %v980 = vld [vmem:[%s5 + $0x1f8] sm:$0xf]
    %v981 = vld [vmem:[%s5 + $0x1fc] sm:$0xf]
    %v982 = vunpack.c.l.bf16 %v854
    %v983 = vunpack.c.l.bf16 %v855
    %v984 = vunpack.c.l.bf16 %v856
    %v985 = vunpack.c.l.bf16 %v857
    %v986 = vunpack.c.l.bf16 %v858
    %v987 = vunpack.c.l.bf16 %v859
    %v988 = vunpack.c.l.bf16 %v860
    %v989 = vunpack.c.l.bf16 %v861
    %v990 = vunpack.c.l.bf16 %v862
    %v991 = vunpack.c.l.bf16 %v863
    %v992 = vunpack.c.l.bf16 %v864
    %v993 = vunpack.c.l.bf16 %v865
    %v994 = vunpack.c.l.bf16 %v866
    %v995 = vunpack.c.l.bf16 %v867
    %v996 = vunpack.c.l.bf16 %v868
    %v997 = vunpack.c.l.bf16 %v869
    %v998 = vunpack.c.l.bf16 %v870
    %v999 = vunpack.c.l.bf16 %v871
    %v1000 = vunpack.c.l.bf16 %v872
    %v1001 = vunpack.c.l.bf16 %v873
    %v1002 = vunpack.c.l.bf16 %v874
    %v1003 = vunpack.c.l.bf16 %v875
    %v1004 = vunpack.c.l.bf16 %v876
    %v1005 = vunpack.c.l.bf16 %v877
    %v1006 = vunpack.c.l.bf16 %v878
    %v1007 = vunpack.c.l.bf16 %v879
    %v1008 = vunpack.c.l.bf16 %v880
    %v1009 = vunpack.c.l.bf16 %v881
    %v1010 = vunpack.c.l.bf16 %v882
    %v1011 = vunpack.c.l.bf16 %v883
    %v1012 = vunpack.c.l.bf16 %v884
    %v1013 = vunpack.c.l.bf16 %v885
    %v1014 = vunpack.c.l.bf16 %v886
    %v1015 = vunpack.c.l.bf16 %v887
    %v1016 = vunpack.c.l.bf16 %v888
    %v1017 = vunpack.c.l.bf16 %v889
    %v1018 = vunpack.c.l.bf16 %v890
    %v1019 = vunpack.c.l.bf16 %v891
    %v1020 = vunpack.c.l.bf16 %v892
    %v1021 = vunpack.c.l.bf16 %v893
    %v1022 = vunpack.c.l.bf16 %v894
    %v1023 = vunpack.c.l.bf16 %v895
    %v1024 = vunpack.c.l.bf16 %v896
    %v1025 = vunpack.c.l.bf16 %v897
    %v1026 = vunpack.c.l.bf16 %v898
    %v1027 = vunpack.c.l.bf16 %v899
    %v1028 = vunpack.c.l.bf16 %v900
    %v1029 = vunpack.c.l.bf16 %v901
    %v1030 = vunpack.c.l.bf16 %v902
    %v1031 = vunpack.c.l.bf16 %v903
    %v1032 = vunpack.c.l.bf16 %v904
    %v1033 = vunpack.c.l.bf16 %v905
    %v1034 = vunpack.c.l.bf16 %v906
    %v1035 = vunpack.c.l.bf16 %v907
    %v1036 = vunpack.c.l.bf16 %v908
    %v1037 = vunpack.c.l.bf16 %v909
    %v1038 = vunpack.c.l.bf16 %v910
    %v1039 = vunpack.c.l.bf16 %v911
    %v1040 = vunpack.c.l.bf16 %v912
    %v1041 = vunpack.c.l.bf16 %v913
    %v1042 = vunpack.c.l.bf16 %v914
    %v1043 = vunpack.c.l.bf16 %v915
    %v1044 = vunpack.c.l.bf16 %v916
    %v1045 = vunpack.c.l.bf16 %v917
    %v1046 = vunpack.c.l.bf16 %v918
    %v1047 = vunpack.c.l.bf16 %v919
    %v1048 = vunpack.c.l.bf16 %v920
    %v1049 = vunpack.c.l.bf16 %v921
    %v1050 = vunpack.c.l.bf16 %v922
    %v1051 = vunpack.c.l.bf16 %v923
    %v1052 = vunpack.c.l.bf16 %v924
    %v1053 = vunpack.c.l.bf16 %v925
    %v1054 = vunpack.c.l.bf16 %v926
    %v1055 = vunpack.c.l.bf16 %v927
    %v1056 = vunpack.c.l.bf16 %v928
    %v1057 = vunpack.c.l.bf16 %v929
    %v1058 = vunpack.c.l.bf16 %v930
    %v1059 = vunpack.c.l.bf16 %v931
    %v1060 = vunpack.c.l.bf16 %v932
    %v1061 = vunpack.c.l.bf16 %v933
    %v1062 = vunpack.c.l.bf16 %v934
    %v1063 = vunpack.c.l.bf16 %v935
    %v1064 = vunpack.c.l.bf16 %v936
    %v1065 = vunpack.c.l.bf16 %v937
    %v1066 = vunpack.c.l.bf16 %v938
    %v1067 = vunpack.c.l.bf16 %v939
    %v1068 = vunpack.c.l.bf16 %v940
    %v1069 = vunpack.c.l.bf16 %v941
    %v1070 = vunpack.c.l.bf16 %v942
    %v1071 = vunpack.c.l.bf16 %v943
    %v1072 = vunpack.c.l.bf16 %v944
    %v1073 = vunpack.c.l.bf16 %v945
    %v1074 = vunpack.c.l.bf16 %v946
    %v1075 = vunpack.c.l.bf16 %v947
    %v1076 = vunpack.c.l.bf16 %v948
    %v1077 = vunpack.c.l.bf16 %v949
    %v1078 = vunpack.c.l.bf16 %v950
    %v1079 = vunpack.c.l.bf16 %v951
    %v1080 = vunpack.c.l.bf16 %v952
    %v1081 = vunpack.c.l.bf16 %v953
    %v1082 = vunpack.c.l.bf16 %v954
    %v1083 = vunpack.c.l.bf16 %v955
    %v1084 = vunpack.c.l.bf16 %v956
    %v1085 = vunpack.c.l.bf16 %v957
    %v1086 = vunpack.c.l.bf16 %v958
    %v1087 = vunpack.c.l.bf16 %v959
    %v1088 = vunpack.c.l.bf16 %v960
    %v1089 = vunpack.c.l.bf16 %v961
    %v1090 = vunpack.c.l.bf16 %v962
    %v1091 = vunpack.c.l.bf16 %v963
    %v1092 = vunpack.c.l.bf16 %v964
    %v1093 = vunpack.c.l.bf16 %v965
    %v1094 = vunpack.c.l.bf16 %v966
    %v1095 = vunpack.c.l.bf16 %v967
    %v1096 = vunpack.c.l.bf16 %v968
    %v1097 = vunpack.c.l.bf16 %v969
    %v1098 = vunpack.c.l.bf16 %v970
    %v1099 = vunpack.c.l.bf16 %v971
    %v1100 = vunpack.c.l.bf16 %v972
    %v1101 = vunpack.c.l.bf16 %v973
    %v1102 = vunpack.c.l.bf16 %v974
    %v1103 = vunpack.c.l.bf16 %v975
    %v1104 = vunpack.c.l.bf16 %v976
    %v1105 = vunpack.c.l.bf16 %v977
    %v1106 = vunpack.c.l.bf16 %v978
    %v1107 = vunpack.c.l.bf16 %v979
    %v1108 = vunpack.c.l.bf16 %v980
    %v1109 = vunpack.c.l.bf16 %v981
    %vm1110 = vcmask 261120
    %v1111 = vsel %vm1110, %v982, 0.0
    %v1112 = vsel %vm1110, %v983, 0.0
    %v1113 = vadd.f32 %v1111, %v1112
    %v1114 = vsel %vm1110, %v984, 0.0
    %v1115 = vadd.f32 %v1113, %v1114
    %v1116 = vsel %vm1110, %v985, 0.0
    %v1117 = vadd.f32 %v1115, %v1116
    %v1118 = vsel %vm1110, %v986, 0.0
    %v1119 = vadd.f32 %v1117, %v1118
    %v1120 = vsel %vm1110, %v987, 0.0
    %v1121 = vadd.f32 %v1119, %v1120
    %v1122 = vsel %vm1110, %v988, 0.0
    %v1123 = vadd.f32 %v1121, %v1122
    %v1124 = vsel %vm1110, %v989, 0.0
    %v1125 = vadd.f32 %v1123, %v1124
    %v1126 = vsel %vm1110, %v990, 0.0
    %v1127 = vadd.f32 %v1125, %v1126
    %v1128 = vsel %vm1110, %v991, 0.0
    %v1129 = vadd.f32 %v1127, %v1128
    %v1130 = vsel %vm1110, %v992, 0.0
    %v1131 = vadd.f32 %v1129, %v1130
    %v1132 = vsel %vm1110, %v993, 0.0
    %v1133 = vadd.f32 %v1131, %v1132
    %v1134 = vsel %vm1110, %v994, 0.0
    %v1135 = vadd.f32 %v1133, %v1134
    %v1136 = vsel %vm1110, %v995, 0.0
    %v1137 = vadd.f32 %v1135, %v1136
    %v1138 = vsel %vm1110, %v996, 0.0
    %v1139 = vadd.f32 %v1137, %v1138
    %v1140 = vsel %vm1110, %v997, 0.0
    %v1141 = vadd.f32 %v1139, %v1140
    %v1142 = vsel %vm1110, %v998, 0.0
    %v1143 = vadd.f32 %v1141, %v1142
    %v1144 = vsel %vm1110, %v999, 0.0
    %v1145 = vadd.f32 %v1143, %v1144
    %v1146 = vsel %vm1110, %v1000, 0.0
    %v1147 = vadd.f32 %v1145, %v1146
    %v1148 = vsel %vm1110, %v1001, 0.0
    %v1149 = vadd.f32 %v1147, %v1148
    %v1150 = vsel %vm1110, %v1002, 0.0
    %v1151 = vadd.f32 %v1149, %v1150
    %v1152 = vsel %vm1110, %v1003, 0.0
    %v1153 = vadd.f32 %v1151, %v1152
    %v1154 = vsel %vm1110, %v1004, 0.0
    %v1155 = vadd.f32 %v1153, %v1154
    %v1156 = vsel %vm1110, %v1005, 0.0
    %v1157 = vadd.f32 %v1155, %v1156
    %v1158 = vsel %vm1110, %v1006, 0.0
    %v1159 = vadd.f32 %v1157, %v1158
    %v1160 = vsel %vm1110, %v1007, 0.0
    %v1161 = vadd.f32 %v1159, %v1160
    %v1162 = vsel %vm1110, %v1008, 0.0
    %v1163 = vadd.f32 %v1161, %v1162
    %v1164 = vsel %vm1110, %v1009, 0.0
    %v1165 = vadd.f32 %v1163, %v1164
    %v1166 = vsel %vm1110, %v1010, 0.0
    %v1167 = vadd.f32 %v1165, %v1166
    %v1168 = vsel %vm1110, %v1011, 0.0
    %v1169 = vadd.f32 %v1167, %v1168
    %v1170 = vsel %vm1110, %v1012, 0.0
    %v1171 = vadd.f32 %v1169, %v1170
    %v1172 = vsel %vm1110, %v1013, 0.0
    %v1173 = vadd.f32 %v1171, %v1172
    %v1174 = vsel %vm1110, %v1014, 0.0
    %v1175 = vadd.f32 %v1173, %v1174
    %v1176 = vsel %vm1110, %v1015, 0.0
    %v1177 = vadd.f32 %v1175, %v1176
    %v1178 = vsel %vm1110, %v1016, 0.0
    %v1179 = vadd.f32 %v1177, %v1178
    %v1180 = vsel %vm1110, %v1017, 0.0
    %v1181 = vadd.f32 %v1179, %v1180
    %v1182 = vsel %vm1110, %v1018, 0.0
    %v1183 = vadd.f32 %v1181, %v1182
    %v1184 = vsel %vm1110, %v1019, 0.0
    %v1185 = vadd.f32 %v1183, %v1184
    %v1186 = vsel %vm1110, %v1020, 0.0
    %v1187 = vadd.f32 %v1185, %v1186
    %v1188 = vsel %vm1110, %v1021, 0.0
    %v1189 = vadd.f32 %v1187, %v1188
    %v1190 = vsel %vm1110, %v1022, 0.0
    %v1191 = vadd.f32 %v1189, %v1190
    %v1192 = vsel %vm1110, %v1023, 0.0
    %v1193 = vadd.f32 %v1191, %v1192
    %v1194 = vsel %vm1110, %v1024, 0.0
    %v1195 = vadd.f32 %v1193, %v1194
    %v1196 = vsel %vm1110, %v1025, 0.0
    %v1197 = vadd.f32 %v1195, %v1196
    %v1198 = vsel %vm1110, %v1026, 0.0
    %v1199 = vadd.f32 %v1197, %v1198
    %v1200 = vsel %vm1110, %v1027, 0.0
    %v1201 = vadd.f32 %v1199, %v1200
    %v1202 = vsel %vm1110, %v1028, 0.0
    %v1203 = vadd.f32 %v1201, %v1202
    %v1204 = vsel %vm1110, %v1029, 0.0
    %v1205 = vadd.f32 %v1203, %v1204
    %v1206 = vsel %vm1110, %v1030, 0.0
    %v1207 = vadd.f32 %v1205, %v1206
    %v1208 = vsel %vm1110, %v1031, 0.0
    %v1209 = vadd.f32 %v1207, %v1208
    %v1210 = vsel %vm1110, %v1032, 0.0
    %v1211 = vadd.f32 %v1209, %v1210
    %v1212 = vsel %vm1110, %v1033, 0.0
    %v1213 = vadd.f32 %v1211, %v1212
    %v1214 = vsel %vm1110, %v1034, 0.0
    %v1215 = vadd.f32 %v1213, %v1214
    %v1216 = vsel %vm1110, %v1035, 0.0
    %v1217 = vadd.f32 %v1215, %v1216
    %v1218 = vsel %vm1110, %v1036, 0.0
    %v1219 = vadd.f32 %v1217, %v1218
    %v1220 = vsel %vm1110, %v1037, 0.0
    %v1221 = vadd.f32 %v1219, %v1220
    %v1222 = vsel %vm1110, %v1038, 0.0
    %v1223 = vadd.f32 %v1221, %v1222
    %v1224 = vsel %vm1110, %v1039, 0.0
    %v1225 = vadd.f32 %v1223, %v1224
    %v1226 = vsel %vm1110, %v1040, 0.0
    %v1227 = vadd.f32 %v1225, %v1226
    %v1228 = vsel %vm1110, %v1041, 0.0
    %v1229 = vadd.f32 %v1227, %v1228
    %v1230 = vsel %vm1110, %v1042, 0.0
    %v1231 = vadd.f32 %v1229, %v1230
    %v1232 = vsel %vm1110, %v1043, 0.0
    %v1233 = vadd.f32 %v1231, %v1232
    %v1234 = vsel %vm1110, %v1044, 0.0
    %v1235 = vadd.f32 %v1233, %v1234
    %v1236 = vsel %vm1110, %v1045, 0.0
    %v1237 = vadd.f32 %v1235, %v1236
    %v1238 = vsel %vm1110, %v1046, 0.0
    %v1239 = vadd.f32 %v1237, %v1238
    %v1240 = vsel %vm1110, %v1047, 0.0
    %v1241 = vadd.f32 %v1239, %v1240
    %v1242 = vsel %vm1110, %v1048, 0.0
    %v1243 = vadd.f32 %v1241, %v1242
    %v1244 = vsel %vm1110, %v1049, 0.0
    %v1245 = vadd.f32 %v1243, %v1244
    %v1246 = vsel %vm1110, %v1050, 0.0
    %v1247 = vadd.f32 %v1245, %v1246
    %v1248 = vsel %vm1110, %v1051, 0.0
    %v1249 = vadd.f32 %v1247, %v1248
    %v1250 = vsel %vm1110, %v1052, 0.0
    %v1251 = vadd.f32 %v1249, %v1250
    %v1252 = vsel %vm1110, %v1053, 0.0
    %v1253 = vadd.f32 %v1251, %v1252
    %v1254 = vsel %vm1110, %v1054, 0.0
    %v1255 = vadd.f32 %v1253, %v1254
    %v1256 = vsel %vm1110, %v1055, 0.0
    %v1257 = vadd.f32 %v1255, %v1256
    %v1258 = vsel %vm1110, %v1056, 0.0
    %v1259 = vadd.f32 %v1257, %v1258
    %v1260 = vsel %vm1110, %v1057, 0.0
    %v1261 = vadd.f32 %v1259, %v1260
    %v1262 = vsel %vm1110, %v1058, 0.0
    %v1263 = vadd.f32 %v1261, %v1262
    %v1264 = vsel %vm1110, %v1059, 0.0
    %v1265 = vadd.f32 %v1263, %v1264
    %v1266 = vsel %vm1110, %v1060, 0.0
    %v1267 = vadd.f32 %v1265, %v1266
    %v1268 = vsel %vm1110, %v1061, 0.0
    %v1269 = vadd.f32 %v1267, %v1268
    %v1270 = vsel %vm1110, %v1062, 0.0
    %v1271 = vadd.f32 %v1269, %v1270
    %v1272 = vsel %vm1110, %v1063, 0.0
    %v1273 = vadd.f32 %v1271, %v1272
    %v1274 = vsel %vm1110, %v1064, 0.0
    %v1275 = vadd.f32 %v1273, %v1274
    %v1276 = vsel %vm1110, %v1065, 0.0
    %v1277 = vadd.f32 %v1275, %v1276
    %v1278 = vsel %vm1110, %v1066, 0.0
    %v1279 = vadd.f32 %v1277, %v1278
    %v1280 = vsel %vm1110, %v1067, 0.0
    %v1281 = vadd.f32 %v1279, %v1280
    %v1282 = vsel %vm1110, %v1068, 0.0
    %v1283 = vadd.f32 %v1281, %v1282
    %v1284 = vsel %vm1110, %v1069, 0.0
    %v1285 = vadd.f32 %v1283, %v1284
    %v1286 = vsel %vm1110, %v1070, 0.0
    %v1287 = vadd.f32 %v1285, %v1286
    %v1288 = vsel %vm1110, %v1071, 0.0
    %v1289 = vadd.f32 %v1287, %v1288
    %v1290 = vsel %vm1110, %v1072, 0.0
    %v1291 = vadd.f32 %v1289, %v1290
    %v1292 = vsel %vm1110, %v1073, 0.0
    %v1293 = vadd.f32 %v1291, %v1292
    %v1294 = vsel %vm1110, %v1074, 0.0
    %v1295 = vadd.f32 %v1293, %v1294
    %v1296 = vsel %vm1110, %v1075, 0.0
    %v1297 = vadd.f32 %v1295, %v1296
    %v1298 = vsel %vm1110, %v1076, 0.0
    %v1299 = vadd.f32 %v1297, %v1298
    %v1300 = vsel %vm1110, %v1077, 0.0
    %v1301 = vadd.f32 %v1299, %v1300
    %v1302 = vsel %vm1110, %v1078, 0.0
    %v1303 = vadd.f32 %v1301, %v1302
    %v1304 = vsel %vm1110, %v1079, 0.0
    %v1305 = vadd.f32 %v1303, %v1304
    %v1306 = vsel %vm1110, %v1080, 0.0
    %v1307 = vadd.f32 %v1305, %v1306
    %v1308 = vsel %vm1110, %v1081, 0.0
    %v1309 = vadd.f32 %v1307, %v1308
    %v1310 = vsel %vm1110, %v1082, 0.0
    %v1311 = vadd.f32 %v1309, %v1310
    %v1312 = vsel %vm1110, %v1083, 0.0
    %v1313 = vadd.f32 %v1311, %v1312
    %v1314 = vsel %vm1110, %v1084, 0.0
    %v1315 = vadd.f32 %v1313, %v1314
    %v1316 = vsel %vm1110, %v1085, 0.0
    %v1317 = vadd.f32 %v1315, %v1316
    %v1318 = vsel %vm1110, %v1086, 0.0
    %v1319 = vadd.f32 %v1317, %v1318
    %v1320 = vsel %vm1110, %v1087, 0.0
    %v1321 = vadd.f32 %v1319, %v1320
    %v1322 = vsel %vm1110, %v1088, 0.0
    %v1323 = vadd.f32 %v1321, %v1322
    %v1324 = vsel %vm1110, %v1089, 0.0
    %v1325 = vadd.f32 %v1323, %v1324
    %v1326 = vsel %vm1110, %v1090, 0.0
    %v1327 = vadd.f32 %v1325, %v1326
    %v1328 = vsel %vm1110, %v1091, 0.0
    %v1329 = vadd.f32 %v1327, %v1328
    %v1330 = vsel %vm1110, %v1092, 0.0
    %v1331 = vadd.f32 %v1329, %v1330
    %v1332 = vsel %vm1110, %v1093, 0.0
    %v1333 = vadd.f32 %v1331, %v1332
    %v1334 = vsel %vm1110, %v1094, 0.0
    %v1335 = vadd.f32 %v1333, %v1334
    %v1336 = vsel %vm1110, %v1095, 0.0
    %v1337 = vadd.f32 %v1335, %v1336
    %v1338 = vsel %vm1110, %v1096, 0.0
    %v1339 = vadd.f32 %v1337, %v1338
    %v1340 = vsel %vm1110, %v1097, 0.0
    %v1341 = vadd.f32 %v1339, %v1340
    %v1342 = vsel %vm1110, %v1098, 0.0
    %v1343 = vadd.f32 %v1341, %v1342
    %v1344 = vsel %vm1110, %v1099, 0.0
    %v1345 = vadd.f32 %v1343, %v1344
    %v1346 = vsel %vm1110, %v1100, 0.0
    %v1347 = vadd.f32 %v1345, %v1346
    %v1348 = vsel %vm1110, %v1101, 0.0
    %v1349 = vadd.f32 %v1347, %v1348
    %v1350 = vsel %vm1110, %v1102, 0.0
    %v1351 = vadd.f32 %v1349, %v1350
    %v1352 = vsel %vm1110, %v1103, 0.0
    %v1353 = vadd.f32 %v1351, %v1352
    %v1354 = vsel %vm1110, %v1104, 0.0
    %v1355 = vadd.f32 %v1353, %v1354
    %v1356 = vsel %vm1110, %v1105, 0.0
    %v1357 = vadd.f32 %v1355, %v1356
    %v1358 = vsel %vm1110, %v1106, 0.0
    %v1359 = vadd.f32 %v1357, %v1358
    %v1360 = vsel %vm1110, %v1107, 0.0
    %v1361 = vadd.f32 %v1359, %v1360
    %v1362 = vsel %vm1110, %v1108, 0.0
    %v1363 = vadd.f32 %v1361, %v1362
    %v1364 = vsel %vm1110, %v1109, 0.0
    %v1365 = vadd.f32 %v1363, %v1364
    %v1366 = vrot.slane %v1365, 4
    %v1367 = vadd.f32 %v1365, %v1366
    %v1368 = vrot.slane %v1367, 2
    %v1369 = vadd.f32 %v1367, %v1368
    %v1370 = vrot.slane %v1369, 1
    %v1371 = vadd.f32 %v1369, %v1370
    %v1372 = vld [vmem:[%s6] sm:$0x1]
    %v1373 = vadd.f32 %v1371, %v1372
    %v1374 = vlaneseq
    %v1375 = vshrl.u32 %v1374, 7
    %v1376 = vsub.s32 0, %v1375
    %v1377 = vrot.slane %v1373, %v1376
    %v1378 = vmul.f32 %v1377, %v847
    %v1379 = vld [vmem:[%s7] sm:$0x1]
    %v1381 = vlaneseq
    %v1382 = vshrl.u32 %v1381, 7
    %v1383 = vsub.s32 0, %v1382
    %v1384 = vrot.slane %v1379, %v1383
    %v1386 = vmul.f32 %v1378, %v1384
    %v1387 = vld [vmem:[%s8] sm:$0x1]
    %v1389 = vlaneseq
    %v1390 = vshrl.u32 %v1389, 7
    %v1391 = vsub.s32 0, %v1390
    %v1392 = vrot.slane %v1387, %v1391
    %v1394 = vadd.f32 %v1386, %v1392
    %v1395 = vmul.f32 %v1394, %v853
    %v1396 = vpack.c.bf16 %v841, %v841
    %v1397 = vld [vmem:[%s9] sm:$0xf]
    %v1398 = vld [vmem:[%s9 + $0x4] sm:$0xf]
    %v1399 = vld [vmem:[%s9 + $0x8] sm:$0xf]
    %v1400 = vld [vmem:[%s9 + $0xc] sm:$0xf]
    %v1401 = vld [vmem:[%s10] sm:$0x1]
    %v1403 = vlaneseq
    %v1404 = vshrl.u32 %v1403, 7
    %v1405 = vsub.s32 0, %v1404
    %v1406 = vrot.slane %v1401, %v1405
    %v1412 = vunpack.c.l.b16 %v1397
    %v1413 = vunpack.c.l.b16 %v1398
    %v1414 = vunpack.c.l.b16 %v1399
    %v1415 = vunpack.c.l.b16 %v1400
    %v1416 = vpack.c.b16 %v1413, %v1412
    %v1417 = vpack.c.b16 %v1415, %v1414
    %v1421 = vsel %vm1110, %v1396, 0
    %1423 = vmatprep.subr.bf16.mxu0 0
    %1424 = vmatpush1.bf16.msra.mxu0 0
    %1425 = vmatprep.subr.bf16.mxu0 0
    %1426 = vmatpush1.bf16.msra.mxu0 0
    %1427 = vmatprep.subr.bf16.mxu0 0
    %1428 = vmatpush1.bf16.msra.mxu0 0
    %1429 = vmatprep.subr.bf16.mxu0 0
    %1430 = vmatpush1.bf16.msra.mxu0 0
    %1431 = vmatprep.subr.bf16.mxu0 0
    %1432 = vmatpush1.bf16.msra.mxu0 0
    %1433 = vmatprep.subr.bf16.mxu0 0
    %1434 = vmatpush1.bf16.msra.mxu0 0
    %1435 = vmatprep.subr.bf16.mxu0 0
    %1436 = vmatpush1.bf16.msra.mxu0 %v1417
    %1437 = vmatprep.subr.bf16.mxu0 0
    %1438 = vmatpush1.bf16.msra.mxu0 %v1416
    %1439 = vmatprep.subr.bf16.mxu0 0
    %1440 = vmatpush2.bf16.msra.mxu0 0
    %1441 = vmatprep.subr.bf16.mxu0 0
    %1442 = vmatpush2.bf16.msra.mxu0 0
    %1443 = vmatprep.subr.bf16.mxu0 0
    %1444 = vmatpush2.bf16.msra.mxu0 0
    %1445 = vmatprep.subr.bf16.mxu0 0
    %1446 = vmatpush2.bf16.msra.mxu0 0
    %1447 = vmatprep.subr.bf16.mxu0 0
    %1448 = vmatpush2.bf16.msra.mxu0 0
    %1449 = vmatprep.subr.bf16.mxu0 0
    %1450 = vmatpush2.bf16.msra.mxu0 0
    %1451 = vmatprep.subr.bf16.mxu0 0
    %1452 = vmatpush2.bf16.msra.mxu0 0
    %1453 = vmatprep.subr.bf16.mxu0 0
    %1454 = vmatpush2.bf16.msra.mxu0 0
    %1455 = vmatprep.mubr.bf16.mxu0 0
    %1456 = vmatmul.mubr.bf16.gmra.mxu0 %v1421
    %v1457 = vpop.f32.mrf.mxu0
    %v1458 = vadd.f32 %v1406, %v1457
    %v1459 = vpop.f32.mrf.mxu0
    %v1460 = vpop.f32.mrf.mxu0
    %v1461 = vpop.f32.mrf.mxu0
    %1462 = vdwg.mxu0
    %v1463 = vld [vmem:[%s11] sm:$0x1]
    %v1465 = vlaneseq
    %v1466 = vshrl.u32 %v1465, 7
    %v1467 = vsub.s32 0, %v1466
    %v1468 = vrot.slane %v1463, %v1467
    %v1470 = vmul.f32 %v1458, %v1468
    %v1471 = vld [vmem:[%s12] sm:$0x1]
    %v1473 = vlaneseq
    %v1474 = vshrl.u32 %v1473, 7
    %v1475 = vsub.s32 0, %v1474
    %v1476 = vrot.slane %v1471, %v1475
    %v1478 = vadd.f32 %v1470, %v1476
    %v1479 = vmul.f32 %v1458, -4.0
    %v1480 = vmul.f32 %v1479, 1.442695
    %v1481 = vpow.pop %v1480
    %v1482 = vadd.f32 %v1481, 1.0
    %v1483 = vrcp.pop %v1482
    %v1484 = vmul.f32 1.0, %v1483
    %v1485 = vmul.f32 %v1478, -4.0
    %v1486 = vmul.f32 %v1485, 1.442695
    %v1487 = vpow.pop %v1486
    %v1488 = vadd.f32 %v1487, 1.0
    %v1489 = vrcp.pop %v1488
    %v1490 = vmul.f32 1.0, %v1489
    %v1491 = vpack.c.bf16 %v1395, %v1395
    %v1492 = vld [vmem:[%s13] sm:$0xf]
    %v1493 = vld [vmem:[%s13 + $0x4] sm:$0xf]
    %v1494 = vld [vmem:[%s13 + $0x8] sm:$0xf]
    %v1495 = vld [vmem:[%s13 + $0xc] sm:$0xf]
    %v1496 = vld [vmem:[%s14] sm:$0x1]
    %v1498 = vlaneseq
    %v1499 = vshrl.u32 %v1498, 7
    %v1500 = vsub.s32 0, %v1499
    %v1501 = vrot.slane %v1496, %v1500
    %v1507 = vunpack.c.l.b16 %v1492
    %v1508 = vunpack.c.l.b16 %v1493
    %v1509 = vunpack.c.l.b16 %v1494
    %v1510 = vunpack.c.l.b16 %v1495
    %v1511 = vpack.c.b16 %v1508, %v1507
    %v1512 = vpack.c.b16 %v1510, %v1509
    %v1516 = vsel %vm1110, %v1491, 0
    %1518 = vmatprep.subr.bf16.mxu0 0
    %1519 = vmatpush1.bf16.msra.mxu0 0
    %1520 = vmatprep.subr.bf16.mxu0 0
    %1521 = vmatpush1.bf16.msra.mxu0 0
    %1522 = vmatprep.subr.bf16.mxu0 0
    %1523 = vmatpush1.bf16.msra.mxu0 0
    %1524 = vmatprep.subr.bf16.mxu0 0
    %1525 = vmatpush1.bf16.msra.mxu0 0
    %1526 = vmatprep.subr.bf16.mxu0 0
    %1527 = vmatpush1.bf16.msra.mxu0 0
    %1528 = vmatprep.subr.bf16.mxu0 0
    %1529 = vmatpush1.bf16.msra.mxu0 0
    %1530 = vmatprep.subr.bf16.mxu0 0
    %1531 = vmatpush1.bf16.msra.mxu0 %v1512
    %1532 = vmatprep.subr.bf16.mxu0 0
    %1533 = vmatpush1.bf16.msra.mxu0 %v1511
    %1534 = vmatprep.subr.bf16.mxu0 0
    %1535 = vmatpush2.bf16.msra.mxu0 0
    %1536 = vmatprep.subr.bf16.mxu0 0
    %1537 = vmatpush2.bf16.msra.mxu0 0
    %1538 = vmatprep.subr.bf16.mxu0 0
    %1539 = vmatpush2.bf16.msra.mxu0 0
    %1540 = vmatprep.subr.bf16.mxu0 0
    %1541 = vmatpush2.bf16.msra.mxu0 0
    %1542 = vmatprep.subr.bf16.mxu0 0
    %1543 = vmatpush2.bf16.msra.mxu0 0
    %1544 = vmatprep.subr.bf16.mxu0 0
    %1545 = vmatpush2.bf16.msra.mxu0 0
    %1546 = vmatprep.subr.bf16.mxu0 0
    %1547 = vmatpush2.bf16.msra.mxu0 0
    %1548 = vmatprep.subr.bf16.mxu0 0
    %1549 = vmatpush2.bf16.msra.mxu0 0
    %1550 = vmatprep.mubr.bf16.mxu0 0
    %1551 = vmatmul.mubr.bf16.gmra.mxu0 %v1516
    %v1552 = vpop.f32.mrf.mxu0
    %v1553 = vadd.f32 %v1501, %v1552
    %v1554 = vpop.f32.mrf.mxu0
    %v1555 = vpop.f32.mrf.mxu0
    %v1556 = vpop.f32.mrf.mxu0
    %1557 = vdwg.mxu0
    %v1558 = vmul.f32 %v1553, %v1484
    %v1559 = vld [vmem:[%s15] sm:$0x1]
    %v1561 = vlaneseq
    %v1562 = vshrl.u32 %v1561, 7
    %v1563 = vsub.s32 0, %v1562
    %v1564 = vrot.slane %v1559, %v1563
    %v1566 = vmul.f32 %v1558, %v1564
    %v1567 = vld [vmem:[%s16] sm:$0x1]
    %v1569 = vlaneseq
    %v1570 = vshrl.u32 %v1569, 7
    %v1571 = vsub.s32 0, %v1570
    %v1572 = vrot.slane %v1567, %v1571
    %v1574 = vadd.f32 %v1566, %v1572
    %v1575 = vmul.f32 %v1574, %v1490
    %v1576 = vpack.c.bf16 %v1478, %v1478
    %v1577 = vld [vmem:[%s17] sm:$0xf]
    %v1578 = vld [vmem:[%s17 + $0x4] sm:$0xf]
    %v1579 = vld [vmem:[%s17 + $0x8] sm:$0xf]
    %v1580 = vld [vmem:[%s17 + $0xc] sm:$0xf]
    %v1581 = vld [vmem:[%s17 + $0x10] sm:$0xf]
    %v1582 = vld [vmem:[%s17 + $0x14] sm:$0xf]
    %v1583 = vld [vmem:[%s17 + $0x18] sm:$0xf]
    %v1584 = vld [vmem:[%s17 + $0x1c] sm:$0xf]
    %v1585 = vld [vmem:[%s18] sm:$0x1]
    %v1587 = vlaneseq
    %v1588 = vshrl.u32 %v1587, 7
    %v1589 = vsub.s32 0, %v1588
    %v1590 = vrot.slane %v1585, %v1589
    %v1600 = vunpack.c.l.b16 %v1577
    %v1601 = vunpack.c.l.b16 %v1578
    %v1602 = vunpack.c.l.b16 %v1579
    %v1603 = vunpack.c.l.b16 %v1580
    %v1604 = vunpack.c.l.b16 %v1581
    %v1605 = vunpack.c.l.b16 %v1582
    %v1606 = vunpack.c.l.b16 %v1583
    %v1607 = vunpack.c.l.b16 %v1584
    %v1608 = vpack.c.b16 %v1601, %v1600
    %v1609 = vpack.c.b16 %v1603, %v1602
    %v1610 = vpack.c.b16 %v1605, %v1604
    %v1611 = vpack.c.b16 %v1607, %v1606
    %vm1616 = vcmask 523264
    %v1618 = vsel %vm1616, %v1576, 0
    %1620 = vmatprep.subr.bf16.mxu0 0
    %1621 = vmatpush1.bf16.msra.mxu0 0
    %1622 = vmatprep.subr.bf16.mxu0 0
    %1623 = vmatpush1.bf16.msra.mxu0 0
    %1624 = vmatprep.subr.bf16.mxu0 0
    %1625 = vmatpush1.bf16.msra.mxu0 0
    %1626 = vmatprep.subr.bf16.mxu0 0
    %1627 = vmatpush1.bf16.msra.mxu0 0
    %1628 = vmatprep.subr.bf16.mxu0 0
    %1629 = vmatpush1.bf16.msra.mxu0 %v1611
    %1630 = vmatprep.subr.bf16.mxu0 0
    %1631 = vmatpush1.bf16.msra.mxu0 %v1610
    %1632 = vmatprep.subr.bf16.mxu0 0
    %1633 = vmatpush1.bf16.msra.mxu0 %v1609
    %1634 = vmatprep.subr.bf16.mxu0 0
    %1635 = vmatpush1.bf16.msra.mxu0 %v1608
    %1636 = vmatprep.subr.bf16.mxu0 0
    %1637 = vmatpush2.bf16.msra.mxu0 0
    %1638 = vmatprep.subr.bf16.mxu0 0
    %1639 = vmatpush2.bf16.msra.mxu0 0
    %1640 = vmatprep.subr.bf16.mxu0 0
    %1641 = vmatpush2.bf16.msra.mxu0 0
    %1642 = vmatprep.subr.bf16.mxu0 0
    %1643 = vmatpush2.bf16.msra.mxu0 0
    %1644 = vmatprep.subr.bf16.mxu0 0
    %1645 = vmatpush2.bf16.msra.mxu0 0
    %1646 = vmatprep.subr.bf16.mxu0 0
    %1647 = vmatpush2.bf16.msra.mxu0 0
    %1648 = vmatprep.subr.bf16.mxu0 0
    %1649 = vmatpush2.bf16.msra.mxu0 0
    %1650 = vmatprep.subr.bf16.mxu0 0
    %1651 = vmatpush2.bf16.msra.mxu0 0
    %1652 = vmatprep.mubr.bf16.mxu0 0
    %1653 = vmatmul.mubr.bf16.gmra.mxu0 %v1618
    %v1654 = vpop.f32.mrf.mxu0
    %v1655 = vadd.f32 %v1590, %v1654
    %v1656 = vpop.f32.mrf.mxu0
    %v1657 = vpop.f32.mrf.mxu0
    %v1658 = vpop.f32.mrf.mxu0
    %1659 = vdwg.mxu0
    %v1660 = vld [vmem:[%s19] sm:$0x1]
    %v1662 = vlaneseq
    %v1663 = vshrl.u32 %v1662, 7
    %v1664 = vsub.s32 0, %v1663
    %v1665 = vrot.slane %v1660, %v1664
    %v1667 = vmul.f32 %v1655, %v1665
    %v1668 = vld [vmem:[%s20] sm:$0x1]
    %v1670 = vlaneseq
    %v1671 = vshrl.u32 %v1670, 7
    %v1672 = vsub.s32 0, %v1671
    %v1673 = vrot.slane %v1668, %v1672
    %v1675 = vadd.f32 %v1667, %v1673
    %v1676 = vmul.f32 %v1655, -4.0
    %v1677 = vmul.f32 %v1676, 1.442695
    %v1678 = vpow.pop %v1677
    %v1679 = vadd.f32 %v1678, 1.0
    %v1680 = vrcp.pop %v1679
    %v1681 = vmul.f32 1.0, %v1680
    %v1682 = vmul.f32 %v1675, -4.0
    %v1683 = vmul.f32 %v1682, 1.442695
    %v1684 = vpow.pop %v1683
    %v1685 = vadd.f32 %v1684, 1.0
    %v1686 = vrcp.pop %v1685
    %v1687 = vmul.f32 1.0, %v1686
    %v1688 = vpack.c.bf16 %v1575, %v1575
    %v1689 = vld [vmem:[%s21] sm:$0xf]
    %v1690 = vld [vmem:[%s21 + $0x4] sm:$0xf]
    %v1691 = vld [vmem:[%s21 + $0x8] sm:$0xf]
    %v1692 = vld [vmem:[%s21 + $0xc] sm:$0xf]
    %v1693 = vld [vmem:[%s21 + $0x10] sm:$0xf]
    %v1694 = vld [vmem:[%s21 + $0x14] sm:$0xf]
    %v1695 = vld [vmem:[%s21 + $0x18] sm:$0xf]
    %v1696 = vld [vmem:[%s21 + $0x1c] sm:$0xf]
    %v1697 = vld [vmem:[%s22] sm:$0x1]
    %v1699 = vlaneseq
    %v1700 = vshrl.u32 %v1699, 7
    %v1701 = vsub.s32 0, %v1700
    %v1702 = vrot.slane %v1697, %v1701
    %v1712 = vunpack.c.l.b16 %v1689
    %v1713 = vunpack.c.l.b16 %v1690
    %v1714 = vunpack.c.l.b16 %v1691
    %v1715 = vunpack.c.l.b16 %v1692
    %v1716 = vunpack.c.l.b16 %v1693
    %v1717 = vunpack.c.l.b16 %v1694
    %v1718 = vunpack.c.l.b16 %v1695
    %v1719 = vunpack.c.l.b16 %v1696
    %v1720 = vpack.c.b16 %v1713, %v1712
    %v1721 = vpack.c.b16 %v1715, %v1714
    %v1722 = vpack.c.b16 %v1717, %v1716
    %v1723 = vpack.c.b16 %v1719, %v1718
    %v1729 = vsel %vm1616, %v1688, 0
    %1731 = vmatprep.subr.bf16.mxu0 0
    %1732 = vmatpush1.bf16.msra.mxu0 0
    %1733 = vmatprep.subr.bf16.mxu0 0
    %1734 = vmatpush1.bf16.msra.mxu0 0
    %1735 = vmatprep.subr.bf16.mxu0 0
    %1736 = vmatpush1.bf16.msra.mxu0 0
    %1737 = vmatprep.subr.bf16.mxu0 0
    %1738 = vmatpush1.bf16.msra.mxu0 0
    %1739 = vmatprep.subr.bf16.mxu0 0
    %1740 = vmatpush1.bf16.msra.mxu0 %v1723
    %1741 = vmatprep.subr.bf16.mxu0 0
    %1742 = vmatpush1.bf16.msra.mxu0 %v1722
    %1743 = vmatprep.subr.bf16.mxu0 0
    %1744 = vmatpush1.bf16.msra.mxu0 %v1721
    %1745 = vmatprep.subr.bf16.mxu0 0
    %1746 = vmatpush1.bf16.msra.mxu0 %v1720
    %1747 = vmatprep.subr.bf16.mxu0 0
    %1748 = vmatpush2.bf16.msra.mxu0 0
    %1749 = vmatprep.subr.bf16.mxu0 0
    %1750 = vmatpush2.bf16.msra.mxu0 0
    %1751 = vmatprep.subr.bf16.mxu0 0
    %1752 = vmatpush2.bf16.msra.mxu0 0
    %1753 = vmatprep.subr.bf16.mxu0 0
    %1754 = vmatpush2.bf16.msra.mxu0 0
    %1755 = vmatprep.subr.bf16.mxu0 0
    %1756 = vmatpush2.bf16.msra.mxu0 0
    %1757 = vmatprep.subr.bf16.mxu0 0
    %1758 = vmatpush2.bf16.msra.mxu0 0
    %1759 = vmatprep.subr.bf16.mxu0 0
    %1760 = vmatpush2.bf16.msra.mxu0 0
    %1761 = vmatprep.subr.bf16.mxu0 0
    %1762 = vmatpush2.bf16.msra.mxu0 0
    %1763 = vmatprep.mubr.bf16.mxu0 0
    %1764 = vmatmul.mubr.bf16.gmra.mxu0 %v1729
    %v1765 = vpop.f32.mrf.mxu0
    %v1766 = vadd.f32 %v1702, %v1765
    %v1767 = vpop.f32.mrf.mxu0
    %v1768 = vpop.f32.mrf.mxu0
    %v1769 = vpop.f32.mrf.mxu0
    %1770 = vdwg.mxu0
    %v1771 = vmul.f32 %v1766, %v1681
    %v1772 = vld [vmem:[%s23] sm:$0x1]
    %v1774 = vlaneseq
    %v1775 = vshrl.u32 %v1774, 7
    %v1776 = vsub.s32 0, %v1775
    %v1777 = vrot.slane %v1772, %v1776
    %v1779 = vmul.f32 %v1771, %v1777
    %v1780 = vld [vmem:[%s24] sm:$0x1]
    %v1782 = vlaneseq
    %v1783 = vshrl.u32 %v1782, 7
    %v1784 = vsub.s32 0, %v1783
    %v1785 = vrot.slane %v1780, %v1784
    %v1787 = vadd.f32 %v1779, %v1785
    %v1788 = vmul.f32 %v1787, %v1687
    %v1789 = vpack.c.bf16 %v1788, %v1788
    %v1790 = vld [vmem:[%s25] sm:$0xf]
    %v1791 = vld [vmem:[%s25 + $0x4] sm:$0xf]
    %v1792 = vld [vmem:[%s25 + $0x8] sm:$0xf]
    %v1793 = vld [vmem:[%s25 + $0xc] sm:$0xf]
    %v1794 = vld [vmem:[%s26] sm:$0x1]
    %v1796 = vlaneseq
    %v1797 = vshrl.u32 %v1796, 7
    %v1798 = vsub.s32 0, %v1797
    %v1799 = vrot.slane %v1794, %v1798
    %v1805 = vunpack.c.l.b16 %v1790
    %v1806 = vunpack.c.l.b16 %v1791
    %v1807 = vunpack.c.l.b16 %v1792
    %v1808 = vunpack.c.l.b16 %v1793
    %v1809 = vpack.c.b16 %v1806, %v1805
    %v1810 = vpack.c.b16 %v1808, %v1807
    %v1814 = vsel %vm1110, %v1789, 0
    %1816 = vmatprep.subr.bf16.mxu0 0
    %1817 = vmatpush1.bf16.msra.mxu0 0
    %1818 = vmatprep.subr.bf16.mxu0 0
    %1819 = vmatpush1.bf16.msra.mxu0 0
    %1820 = vmatprep.subr.bf16.mxu0 0
    %1821 = vmatpush1.bf16.msra.mxu0 0
    %1822 = vmatprep.subr.bf16.mxu0 0
    %1823 = vmatpush1.bf16.msra.mxu0 0
    %1824 = vmatprep.subr.bf16.mxu0 0
    %1825 = vmatpush1.bf16.msra.mxu0 0
    %1826 = vmatprep.subr.bf16.mxu0 0
    %1827 = vmatpush1.bf16.msra.mxu0 0
    %1828 = vmatprep.subr.bf16.mxu0 0
    %1829 = vmatpush1.bf16.msra.mxu0 %v1810
    %1830 = vmatprep.subr.bf16.mxu0 0
    %1831 = vmatpush1.bf16.msra.mxu0 %v1809
    %1832 = vmatprep.subr.bf16.mxu0 0
    %1833 = vmatpush2.bf16.msra.mxu0 0
    %1834 = vmatprep.subr.bf16.mxu0 0
    %1835 = vmatpush2.bf16.msra.mxu0 0
    %1836 = vmatprep.subr.bf16.mxu0 0
    %1837 = vmatpush2.bf16.msra.mxu0 0
    %1838 = vmatprep.subr.bf16.mxu0 0
    %1839 = vmatpush2.bf16.msra.mxu0 0
    %1840 = vmatprep.subr.bf16.mxu0 0
    %1841 = vmatpush2.bf16.msra.mxu0 0
    %1842 = vmatprep.subr.bf16.mxu0 0
    %1843 = vmatpush2.bf16.msra.mxu0 0
    %1844 = vmatprep.subr.bf16.mxu0 0
    %1845 = vmatpush2.bf16.msra.mxu0 0
    %1846 = vmatprep.subr.bf16.mxu0 0
    %1847 = vmatpush2.bf16.msra.mxu0 0
    %1848 = vmatprep.mubr.bf16.mxu0 0
    %1849 = vmatmul.mubr.bf16.gmra.mxu0 %v1814
    %v1850 = vpop.f32.mrf.mxu0
    %v1851 = vadd.f32 %v1799, %v1850
    %v1852 = vpop.f32.mrf.mxu0
    %v1853 = vpop.f32.mrf.mxu0
    %v1854 = vpop.f32.mrf.mxu0
    %1855 = vdwg.mxu0
    %1856 = vst [vmem:[#allocation2] sm:$0x3] %v1851
    // Predicated region
    $region110: #{dlgn_fc_bn_forward.1} parent=1 // pred_check
      _
    $region111: #{dlgn_fc_bn_forward.1} parent=1 // pred_check_branch
      %1858 = sbr.rel (0) target = $region113
    $region112: #{dlgn_fc_bn_forward.1} parent=1 // pred_region
      %s1860 = ssub.s32 32, 32
      %1861 = vsyncadd [#allocation3], %s1860
      %s1863 = sshll.u32 [#allocation2], 4
      %s1864 = int_to_ptr.vmem [resolvable:$true] %s1863
      %1866 = dma.vmem_to_hbm [thread:$0]  %s1864, 32, %s27, [#allocation3]
    $region113: #{dlgn_fc_bn_forward.1} parent=1 // pred_fallthru
      _
    // Predicated region
    $region114: #{dlgn_fc_bn_forward.1} parent=1 // pred_check
      _
    $region115: #{dlgn_fc_bn_forward.1} parent=1 // pred_check_branch
      %1868 = sbr.rel (0) target = $region117
    $region116: #{dlgn_fc_bn_forward.1} parent=1 // pred_region
      %1869 = dma.done [#allocation3], 32
    $region117: #{dlgn_fc_bn_forward.1} parent=1 // pred_fallthru
      _
    %1870 = vsyncpa [#allocation3], 1

</llo_original>
